<compile_context>
chip_gen: v7x
topology: tpu7x:2x2x1
jax: 0.10.0
libtpu: 0.0.40
codegen_flags: <defaults>
</compile_context>

<pallas_src>
import functools

import jax
import jax.numpy as jnp
from jax.experimental import pallas as pl
from jax.experimental.pallas import tpu as pltpu


def _deepset_kernel(
    x_ref,                      # (TS, Din, TB)   set-chunk of transposed inputs
    w1_ref, b1_ref,             # phi: (H, Din), (H, 1)
    w2_ref, b2_ref,             # phi: (H, H),   (H, 1)
    w3_ref, b3_ref,             # phi: (L, H),   (L, 1)
    r1_ref, c1_ref,             # rho: (H, L),   (H, 1)
    r2_ref, c2_ref,             # rho: (H, H),   (H, 1)
    r3_ref, c3_ref,             # rho: (Dout,H), (Dout, 1)
    o_ref,                      # (Dout, TB)     lane-dense output slab
    acc_ref,                    # VMEM scratch (L, TB) f32 pooled accumulator
    *, set_chunk, inv_set_size,
):
    k = pl.program_id(1)

    @pl.when(k == 0)
    def _init():
        acc_ref[...] = jnp.zeros_like(acc_ref)

    # phi on every set element of this chunk; sum into the pooled accumulator.
    partial = jnp.zeros_like(acc_ref[...])
    for s in range(set_chunk):                       # small static unroll (<= 8)
        xs = x_ref[s]                                # (Din, TB)
        h = jnp.dot(w1_ref[...], xs, preferred_element_type=jnp.float32) + b1_ref[...]
        h = jnp.maximum(h, 0.0)
        h = jnp.dot(w2_ref[...], h, preferred_element_type=jnp.float32) + b2_ref[...]
        h = jnp.maximum(h, 0.0)
        partial = partial + (
            jnp.dot(w3_ref[...], h, preferred_element_type=jnp.float32) + b3_ref[...]
        )
    acc_ref[...] += partial

    # finalize: mean over the set (scalar multiply, not a matrix), then rho,
    # then a single lane-dense store of the (Dout, TB) result.
    @pl.when(k == pl.num_programs(1) - 1)
    def _finalize():
        z = acc_ref[...] * inv_set_size              # (L, TB)
        g = jnp.dot(r1_ref[...], z, preferred_element_type=jnp.float32) + c1_ref[...]
        g = jnp.maximum(g, 0.0)
        g = jnp.dot(r2_ref[...], g, preferred_element_type=jnp.float32) + c2_ref[...]
        g = jnp.maximum(g, 0.0)
        out = jnp.dot(r3_ref[...], g, preferred_element_type=jnp.float32) + c3_ref[...]
        o_ref[...] = out.astype(o_ref.dtype)


def _pick_set_chunk(S):
    """Largest divisor of S that is <= 8, preferring >= 2 chunks when S > 1."""
    cap = min(8, S if S == 1 else max(1, S // 2))
    for c in range(cap, 0, -1):
        if S % c == 0:
            return c
    return 1


def deepset_forward(x, params):
    """x: (B, S, Din) float32. params: (in,out) weights / (out,) biases."""
    B, S, Din = x.shape
    H = params["w1"].shape[1]
    L = params["w3"].shape[1]
    Dout = params["r3"].shape[1]

    # ---- tile selection -----------------------------------------------------
    TS = _pick_set_chunk(S)                    # set-chunk (reduction) tile
    if B > 256:
        TB = 256                               # multiple of 128 -> lane-dense
        Bp = pl.cdiv(B, TB) * TB               # pad batch to a tile multiple
    else:
        TB = B                                 # full-extent block (allowed)
        Bp = B
    nb, nk = Bp // TB, S // TS

    # ---- lane-dense layout: batch on the 128-lane (last) axis ----------------
    xT = jnp.transpose(x, (1, 2, 0))           # (S, Din, B)
    if Bp != B:
        xT = jnp.pad(xT, ((0, 0), (0, 0), (0, Bp - B)))

    # weights transposed to (out, in); biases as (out, 1) columns so the
    # kernel computes W^T @ X with batch staying on lanes throughout.
    w1, b1 = params["w1"].T, params["b1"][:, None]
    w2, b2 = params["w2"].T, params["b2"][:, None]
    w3, b3 = params["w3"].T, params["b3"][:, None]
    r1, c1 = params["r1"].T, params["c1"][:, None]
    r2, c2 = params["r2"].T, params["c2"][:, None]
    r3, c3 = params["r3"].T, params["c3"][:, None]
    weight_args = (w1, b1, w2, b2, w3, b3, r1, c1, r2, c2, r3, c3)

    def const_spec(a):
        # full-extent block + constant index map -> fetched once, VMEM-resident.
        return pl.BlockSpec(a.shape, lambda i, k: (0,) * a.ndim)

    kernel = functools.partial(
        _deepset_kernel, set_chunk=TS, inv_set_size=1.0 / float(S)
    )

    outT = pl.pallas_call(
        kernel,
        out_shape=jax.ShapeDtypeStruct((Dout, Bp), jnp.float32),
        grid_spec=pltpu.PrefetchScalarGridSpec(
            num_scalar_prefetch=0,
            grid=(nb, nk),                                  # reduction axis last
            in_specs=[pl.BlockSpec((TS, Din, TB), lambda i, k: (k, 0, i))]
                     + [const_spec(a) for a in weight_args],
            out_specs=pl.BlockSpec((Dout, TB), lambda i, k: (0, i)),
            scratch_shapes=[pltpu.VMEM((L, TB), jnp.float32)],
        ),
        compiler_params=pltpu.CompilerParams(
            dimension_semantics=("parallel", "arbitrary"),  # batch across TCs
            vmem_limit_bytes=32 * 1024 * 1024,              # safe on v7x's 64 MiB
        ),
    )(xT, *weight_args)

    return outT[:, :B].T                                    # (B, Dout)


def init_params(key, input_dim=1, latent_dim=1, output_dim=1, hidden_dim=16):
    """Deterministic synthetic parameters matching DeepSet.__init__ shapes.

    Weights stored as (in, out); biases as (out,) -- conventional layout.
    """
    ks = jax.random.split(key, 12)

    def lin(kw, kb, din, dout):
        w = jax.random.normal(kw, (din, dout), jnp.float32) * 0.1
        b = jax.random.normal(kb, (dout,), jnp.float32) * 0.1
        return w, b

    w1, b1 = lin(ks[0], ks[1], input_dim, hidden_dim)
    w2, b2 = lin(ks[2], ks[3], hidden_dim, hidden_dim)
    w3, b3 = lin(ks[4], ks[5], hidden_dim, latent_dim)
    r1, c1 = lin(ks[6], ks[7], latent_dim, hidden_dim)
    r2, c2 = lin(ks[8], ks[9], hidden_dim, hidden_dim)
    r3, c3 = lin(ks[10], ks[11], hidden_dim, output_dim)
    return dict(w1=w1, b1=b1, w2=w2, b2=b2, w3=w3, b3=b3,
                r1=r1, c1=c1, r2=r2, c2=c2, r3=r3, c3=c3)


def deepset_reference(x, p):
    """Pure-JAX reference mirroring the PyTorch forward exactly."""
    relu = lambda a: jnp.maximum(a, 0.0)
    h = relu(x @ p["w1"] + p["b1"])
    h = relu(h @ p["w2"] + p["b2"])
    z = h @ p["w3"] + p["b3"]
    z = jnp.mean(z, axis=-2)
    g = relu(z @ p["r1"] + p["c1"])
    g = relu(g @ p["r2"] + p["c2"])
    return g @ p["r3"] + p["c3"]


if __name__ == "__main__":
    # Module defaults: input_dim=1, latent_dim=1, output_dim=1, hidden_dim=16.
    input_dim, latent_dim, output_dim, hidden_dim = 1, 1, 1, 16
    params = init_params(jax.random.PRNGKey(42),
                         input_dim, latent_dim, output_dim, hidden_dim)

    # Small test (batch of 2 sets, 8 elements per set).
    B, S = 2, 8
    x = jax.random.normal(jax.random.PRNGKey(0), (B, S, input_dim), jnp.float32)
    out = jax.block_until_ready(deepset_forward(x, params))
    ref = deepset_reference(x, params)
    assert out.shape == (B, output_dim), out.shape
    assert jnp.allclose(out, ref, atol=1e-5, rtol=1e-4), (out, ref)

    # Moderate test exercising multi-tile batch (two 256-wide lane-dense tiles,
    # megacore-parallel) and the multi-chunk set reduction.
    B2, S2 = 512, 16
    x2 = jax.random.normal(jax.random.PRNGKey(1), (B2, S2, input_dim), jnp.float32)
    out2 = jax.block_until_ready(deepset_forward(x2, params))
    ref2 = deepset_reference(x2, params)
    assert out2.shape == (B2, output_dim), out2.shape
    assert jnp.allclose(out2, ref2, atol=1e-4, rtol=1e-4), \
        float(jnp.max(jnp.abs(out2 - ref2)))

    print("KERNEL_OK")
</pallas_src>

<mosaic_0001>
module attributes {stable_mosaic.version = 11 : i64} {
  func.func @_deepset_kernel(%arg0: i32, %arg1: i32, %arg2: memref<4x1x2xf32, #tpu.memory_space<vmem>>, %arg3: memref<16x1xf32, #tpu.memory_space<vmem>>, %arg4: memref<16x1xf32, #tpu.memory_space<vmem>>, %arg5: memref<16x16xf32, #tpu.memory_space<vmem>>, %arg6: memref<16x1xf32, #tpu.memory_space<vmem>>, %arg7: memref<1x16xf32, #tpu.memory_space<vmem>>, %arg8: memref<1x1xf32, #tpu.memory_space<vmem>>, %arg9: memref<16x1xf32, #tpu.memory_space<vmem>>, %arg10: memref<16x1xf32, #tpu.memory_space<vmem>>, %arg11: memref<16x16xf32, #tpu.memory_space<vmem>>, %arg12: memref<16x1xf32, #tpu.memory_space<vmem>>, %arg13: memref<1x16xf32, #tpu.memory_space<vmem>>, %arg14: memref<1x1xf32, #tpu.memory_space<vmem>>, %arg15: memref<1x2xf32, #tpu.memory_space<vmem>>, %arg16: memref<1x2xf32, #tpu.memory_space<vmem>>) attributes {dimension_semantics = [#tpu.dimension_semantics<parallel>, #tpu.dimension_semantics<arbitrary>], iteration_bounds = array<i64: 1, 2>, scalar_prefetch = 0 : i64, scratch_operands = 1 : i64, tpu.core_type = #tpu.core_type<tc>, window_params = [{transform_indices = @transform_0, window_bounds = array<i64: 4, 1, 2>}, {pipeline_mode = #tpu.pipeline_mode<synchronous>, transform_indices = @transform_1, window_bounds = array<i64: 16, 1>}, {pipeline_mode = #tpu.pipeline_mode<synchronous>, transform_indices = @transform_2, window_bounds = array<i64: 16, 1>}, {pipeline_mode = #tpu.pipeline_mode<synchronous>, transform_indices = @transform_3, window_bounds = array<i64: 16, 16>}, {pipeline_mode = #tpu.pipeline_mode<synchronous>, transform_indices = @transform_4, window_bounds = array<i64: 16, 1>}, {pipeline_mode = #tpu.pipeline_mode<synchronous>, transform_indices = @transform_5, window_bounds = array<i64: 1, 16>}, {pipeline_mode = #tpu.pipeline_mode<synchronous>, transform_indices = @transform_6, window_bounds = array<i64: 1, 1>}, {pipeline_mode = #tpu.pipeline_mode<synchronous>, transform_indices = @transform_7, window_bounds = array<i64: 16, 1>}, {pipeline_mode = #tpu.pipeline_mode<synchronous>, transform_indices = @transform_8, window_bounds = array<i64: 16, 1>}, {pipeline_mode = #tpu.pipeline_mode<synchronous>, transform_indices = @transform_9, window_bounds = array<i64: 16, 16>}, {pipeline_mode = #tpu.pipeline_mode<synchronous>, transform_indices = @transform_10, window_bounds = array<i64: 16, 1>}, {pipeline_mode = #tpu.pipeline_mode<synchronous>, transform_indices = @transform_11, window_bounds = array<i64: 1, 16>}, {pipeline_mode = #tpu.pipeline_mode<synchronous>, transform_indices = @transform_12, window_bounds = array<i64: 1, 1>}, {transform_indices = @transform_13, window_bounds = array<i64: 1, 2>}]} {
    %c0_i32 = arith.constant 0 : i32
    %0 = arith.cmpi eq, %arg1, %c0_i32 : i32
    %1 = arith.extui %0 : i1 to i32
    %c0_i32_0 = arith.constant 0 : i32
    %2 = arith.cmpi ne, %1, %c0_i32_0 : i32
    scf.if %2 {
      %cst_82 = arith.constant 0.000000e+00 : f32
      %98 = vector.broadcast %cst_82 : f32 to vector<1x2xf32>
      %c0_83 = arith.constant 0 : index
      %c0_84 = arith.constant 0 : index
      %99 = vector.load %arg16[%c0_83, %c0_84] : memref<1x2xf32, #tpu.memory_space<vmem>>, vector<1x2xf32>
      tpu.vector_store %arg16[%c0_83, %c0_84], %98 {strides = array<i32>} : memref<1x2xf32, #tpu.memory_space<vmem>>, vector<1x2xf32>,
    } else {
    }
    %cst = arith.constant 0.000000e+00 : f32
    %3 = vector.broadcast %cst : f32 to vector<1x2xf32>
    %c0 = arith.constant 0 : index
    %c0_1 = arith.constant 0 : index
    %c0_2 = arith.constant 0 : index
    %4 = vector.load %arg2[%c0, %c0_1, %c0_2] : memref<4x1x2xf32, #tpu.memory_space<vmem>>, vector<1x1x2xf32>
    %5 = vector.shape_cast %4 : vector<1x1x2xf32> to vector<1x2xf32>
    %c0_3 = arith.constant 0 : index
    %c0_4 = arith.constant 0 : index
    %6 = vector.load %arg3[%c0_3, %c0_4] : memref<16x1xf32, #tpu.memory_space<vmem>>, vector<16x1xf32>
    %cst_5 = arith.constant dense<0.000000e+00> : vector<16x2xf32>
    %7 = tpu.matmul %6, %5, %cst_5 {dimension_numbers = #tpu.dot_dimension_numbers<[1], [0], [0], [1], [0, 0, 1, 1], [], []>} : vector<16x1xf32>, vector<1x2xf32>, vector<16x2xf32> -> vector<16x2xf32>
    %c0_6 = arith.constant 0 : index
    %c0_7 = arith.constant 0 : index
    %8 = vector.load %arg4[%c0_6, %c0_7] : memref<16x1xf32, #tpu.memory_space<vmem>>, vector<16x1xf32>
    %9 = vector.broadcast %8 : vector<16x1xf32> to vector<16x2xf32>
    %10 = arith.addf %7, %9 : vector<16x2xf32>
    %cst_8 = arith.constant 0.000000e+00 : f32
    %11 = vector.broadcast %cst_8 : f32 to vector<16x2xf32>
    %12 = arith.maximumf %10, %11 : vector<16x2xf32>
    %c0_9 = arith.constant 0 : index
    %c0_10 = arith.constant 0 : index
    %13 = vector.load %arg5[%c0_9, %c0_10] : memref<16x16xf32, #tpu.memory_space<vmem>>, vector<16x16xf32>
    %cst_11 = arith.constant dense<0.000000e+00> : vector<16x2xf32>
    %14 = tpu.matmul %13, %12, %cst_11 {dimension_numbers = #tpu.dot_dimension_numbers<[1], [0], [0], [1], [0, 0, 1, 1], [], []>} : vector<16x16xf32>, vector<16x2xf32>, vector<16x2xf32> -> vector<16x2xf32>
    %c0_12 = arith.constant 0 : index
    %c0_13 = arith.constant 0 : index
    %15 = vector.load %arg6[%c0_12, %c0_13] : memref<16x1xf32, #tpu.memory_space<vmem>>, vector<16x1xf32>
    %16 = vector.broadcast %15 : vector<16x1xf32> to vector<16x2xf32>
    %17 = arith.addf %14, %16 : vector<16x2xf32>
    %cst_14 = arith.constant 0.000000e+00 : f32
    %18 = vector.broadcast %cst_14 : f32 to vector<16x2xf32>
    %19 = arith.maximumf %17, %18 : vector<16x2xf32>
    %c0_15 = arith.constant 0 : index
    %c0_16 = arith.constant 0 : index
    %20 = vector.load %arg7[%c0_15, %c0_16] : memref<1x16xf32, #tpu.memory_space<vmem>>, vector<1x16xf32>
    %cst_17 = arith.constant dense<0.000000e+00> : vector<1x2xf32>
    %21 = tpu.matmul %20, %19, %cst_17 {dimension_numbers = #tpu.dot_dimension_numbers<[1], [0], [0], [1], [0, 0, 1, 1], [], []>} : vector<1x16xf32>, vector<16x2xf32>, vector<1x2xf32> -> vector<1x2xf32>
    %c0_18 = arith.constant 0 : index
    %c0_19 = arith.constant 0 : index
    %22 = vector.load %arg8[%c0_18, %c0_19] : memref<1x1xf32, #tpu.memory_space<vmem>>, vector<1x1xf32>
    %23 = vector.broadcast %22 : vector<1x1xf32> to vector<1x2xf32>
    %24 = arith.addf %21, %23 : vector<1x2xf32>
    %25 = arith.addf %3, %24 : vector<1x2xf32>
    %c1 = arith.constant 1 : index
    %c0_20 = arith.constant 0 : index
    %c0_21 = arith.constant 0 : index
    %26 = vector.load %arg2[%c1, %c0_20, %c0_21] : memref<4x1x2xf32, #tpu.memory_space<vmem>>, vector<1x1x2xf32>
    %27 = vector.shape_cast %26 : vector<1x1x2xf32> to vector<1x2xf32>
    %c0_22 = arith.constant 0 : index
    %c0_23 = arith.constant 0 : index
    %28 = vector.load %arg3[%c0_22, %c0_23] : memref<16x1xf32, #tpu.memory_space<vmem>>, vector<16x1xf32>
    %cst_24 = arith.constant dense<0.000000e+00> : vector<16x2xf32>
    %29 = tpu.matmul %28, %27, %cst_24 {dimension_numbers = #tpu.dot_dimension_numbers<[1], [0], [0], [1], [0, 0, 1, 1], [], []>} : vector<16x1xf32>, vector<1x2xf32>, vector<16x2xf32> -> vector<16x2xf32>
    %c0_25 = arith.constant 0 : index
    %c0_26 = arith.constant 0 : index
    %30 = vector.load %arg4[%c0_25, %c0_26] : memref<16x1xf32, #tpu.memory_space<vmem>>, vector<16x1xf32>
    %31 = vector.broadcast %30 : vector<16x1xf32> to vector<16x2xf32>
    %32 = arith.addf %29, %31 : vector<16x2xf32>
    %cst_27 = arith.constant 0.000000e+00 : f32
    %33 = vector.broadcast %cst_27 : f32 to vector<16x2xf32>
    %34 = arith.maximumf %32, %33 : vector<16x2xf32>
    %c0_28 = arith.constant 0 : index
    %c0_29 = arith.constant 0 : index
    %35 = vector.load %arg5[%c0_28, %c0_29] : memref<16x16xf32, #tpu.memory_space<vmem>>, vector<16x16xf32>
    %cst_30 = arith.constant dense<0.000000e+00> : vector<16x2xf32>
    %36 = tpu.matmul %35, %34, %cst_30 {dimension_numbers = #tpu.dot_dimension_numbers<[1], [0], [0], [1], [0, 0, 1, 1], [], []>} : vector<16x16xf32>, vector<16x2xf32>, vector<16x2xf32> -> vector<16x2xf32>
    %c0_31 = arith.constant 0 : index
    %c0_32 = arith.constant 0 : index
    %37 = vector.load %arg6[%c0_31, %c0_32] : memref<16x1xf32, #tpu.memory_space<vmem>>, vector<16x1xf32>
    %38 = vector.broadcast %37 : vector<16x1xf32> to vector<16x2xf32>
    %39 = arith.addf %36, %38 : vector<16x2xf32>
    %cst_33 = arith.constant 0.000000e+00 : f32
    %40 = vector.broadcast %cst_33 : f32 to vector<16x2xf32>
    %41 = arith.maximumf %39, %40 : vector<16x2xf32>
    %c0_34 = arith.constant 0 : index
    %c0_35 = arith.constant 0 : index
    %42 = vector.load %arg7[%c0_34, %c0_35] : memref<1x16xf32, #tpu.memory_space<vmem>>, vector<1x16xf32>
    %cst_36 = arith.constant dense<0.000000e+00> : vector<1x2xf32>
    %43 = tpu.matmul %42, %41, %cst_36 {dimension_numbers = #tpu.dot_dimension_numbers<[1], [0], [0], [1], [0, 0, 1, 1], [], []>} : vector<1x16xf32>, vector<16x2xf32>, vector<1x2xf32> -> vector<1x2xf32>
    %c0_37 = arith.constant 0 : index
    %c0_38 = arith.constant 0 : index
    %44 = vector.load %arg8[%c0_37, %c0_38] : memref<1x1xf32, #tpu.memory_space<vmem>>, vector<1x1xf32>
    %45 = vector.broadcast %44 : vector<1x1xf32> to vector<1x2xf32>
    %46 = arith.addf %43, %45 : vector<1x2xf32>
    %47 = arith.addf %25, %46 : vector<1x2xf32>
    %c2 = arith.constant 2 : index
    %c0_39 = arith.constant 0 : index
    %c0_40 = arith.constant 0 : index
    %48 = vector.load %arg2[%c2, %c0_39, %c0_40] : memref<4x1x2xf32, #tpu.memory_space<vmem>>, vector<1x1x2xf32>
    %49 = vector.shape_cast %48 : vector<1x1x2xf32> to vector<1x2xf32>
    %c0_41 = arith.constant 0 : index
    %c0_42 = arith.constant 0 : index
    %50 = vector.load %arg3[%c0_41, %c0_42] : memref<16x1xf32, #tpu.memory_space<vmem>>, vector<16x1xf32>
    %cst_43 = arith.constant dense<0.000000e+00> : vector<16x2xf32>
    %51 = tpu.matmul %50, %49, %cst_43 {dimension_numbers = #tpu.dot_dimension_numbers<[1], [0], [0], [1], [0, 0, 1, 1], [], []>} : vector<16x1xf32>, vector<1x2xf32>, vector<16x2xf32> -> vector<16x2xf32>
    %c0_44 = arith.constant 0 : index
    %c0_45 = arith.constant 0 : index
    %52 = vector.load %arg4[%c0_44, %c0_45] : memref<16x1xf32, #tpu.memory_space<vmem>>, vector<16x1xf32>
    %53 = vector.broadcast %52 : vector<16x1xf32> to vector<16x2xf32>
    %54 = arith.addf %51, %53 : vector<16x2xf32>
    %cst_46 = arith.constant 0.000000e+00 : f32
    %55 = vector.broadcast %cst_46 : f32 to vector<16x2xf32>
    %56 = arith.maximumf %54, %55 : vector<16x2xf32>
    %c0_47 = arith.constant 0 : index
    %c0_48 = arith.constant 0 : index
    %57 = vector.load %arg5[%c0_47, %c0_48] : memref<16x16xf32, #tpu.memory_space<vmem>>, vector<16x16xf32>
    %cst_49 = arith.constant dense<0.000000e+00> : vector<16x2xf32>
    %58 = tpu.matmul %57, %56, %cst_49 {dimension_numbers = #tpu.dot_dimension_numbers<[1], [0], [0], [1], [0, 0, 1, 1], [], []>} : vector<16x16xf32>, vector<16x2xf32>, vector<16x2xf32> -> vector<16x2xf32>
    %c0_50 = arith.constant 0 : index
    %c0_51 = arith.constant 0 : index
    %59 = vector.load %arg6[%c0_50, %c0_51] : memref<16x1xf32, #tpu.memory_space<vmem>>, vector<16x1xf32>
    %60 = vector.broadcast %59 : vector<16x1xf32> to vector<16x2xf32>
    %61 = arith.addf %58, %60 : vector<16x2xf32>
    %cst_52 = arith.constant 0.000000e+00 : f32
    %62 = vector.broadcast %cst_52 : f32 to vector<16x2xf32>
    %63 = arith.maximumf %61, %62 : vector<16x2xf32>
    %c0_53 = arith.constant 0 : index
    %c0_54 = arith.constant 0 : index
    %64 = vector.load %arg7[%c0_53, %c0_54] : memref<1x16xf32, #tpu.memory_space<vmem>>, vector<1x16xf32>
    %cst_55 = arith.constant dense<0.000000e+00> : vector<1x2xf32>
    %65 = tpu.matmul %64, %63, %cst_55 {dimension_numbers = #tpu.dot_dimension_numbers<[1], [0], [0], [1], [0, 0, 1, 1], [], []>} : vector<1x16xf32>, vector<16x2xf32>, vector<1x2xf32> -> vector<1x2xf32>
    %c0_56 = arith.constant 0 : index
    %c0_57 = arith.constant 0 : index
    %66 = vector.load %arg8[%c0_56, %c0_57] : memref<1x1xf32, #tpu.memory_space<vmem>>, vector<1x1xf32>
    %67 = vector.broadcast %66 : vector<1x1xf32> to vector<1x2xf32>
    %68 = arith.addf %65, %67 : vector<1x2xf32>
    %69 = arith.addf %47, %68 : vector<1x2xf32>
    %c3 = arith.constant 3 : index
    %c0_58 = arith.constant 0 : index
    %c0_59 = arith.constant 0 : index
    %70 = vector.load %arg2[%c3, %c0_58, %c0_59] : memref<4x1x2xf32, #tpu.memory_space<vmem>>, vector<1x1x2xf32>
    %71 = vector.shape_cast %70 : vector<1x1x2xf32> to vector<1x2xf32>
    %c0_60 = arith.constant 0 : index
    %c0_61 = arith.constant 0 : index
    %72 = vector.load %arg3[%c0_60, %c0_61] : memref<16x1xf32, #tpu.memory_space<vmem>>, vector<16x1xf32>
    %cst_62 = arith.constant dense<0.000000e+00> : vector<16x2xf32>
    %73 = tpu.matmul %72, %71, %cst_62 {dimension_numbers = #tpu.dot_dimension_numbers<[1], [0], [0], [1], [0, 0, 1, 1], [], []>} : vector<16x1xf32>, vector<1x2xf32>, vector<16x2xf32> -> vector<16x2xf32>
    %c0_63 = arith.constant 0 : index
    %c0_64 = arith.constant 0 : index
    %74 = vector.load %arg4[%c0_63, %c0_64] : memref<16x1xf32, #tpu.memory_space<vmem>>, vector<16x1xf32>
    %75 = vector.broadcast %74 : vector<16x1xf32> to vector<16x2xf32>
    %76 = arith.addf %73, %75 : vector<16x2xf32>
    %cst_65 = arith.constant 0.000000e+00 : f32
    %77 = vector.broadcast %cst_65 : f32 to vector<16x2xf32>
    %78 = arith.maximumf %76, %77 : vector<16x2xf32>
    %c0_66 = arith.constant 0 : index
    %c0_67 = arith.constant 0 : index
    %79 = vector.load %arg5[%c0_66, %c0_67] : memref<16x16xf32, #tpu.memory_space<vmem>>, vector<16x16xf32>
    %cst_68 = arith.constant dense<0.000000e+00> : vector<16x2xf32>
    %80 = tpu.matmul %79, %78, %cst_68 {dimension_numbers = #tpu.dot_dimension_numbers<[1], [0], [0], [1], [0, 0, 1, 1], [], []>} : vector<16x16xf32>, vector<16x2xf32>, vector<16x2xf32> -> vector<16x2xf32>
    %c0_69 = arith.constant 0 : index
    %c0_70 = arith.constant 0 : index
    %81 = vector.load %arg6[%c0_69, %c0_70] : memref<16x1xf32, #tpu.memory_space<vmem>>, vector<16x1xf32>
    %82 = vector.broadcast %81 : vector<16x1xf32> to vector<16x2xf32>
    %83 = arith.addf %80, %82 : vector<16x2xf32>
    %cst_71 = arith.constant 0.000000e+00 : f32
    %84 = vector.broadcast %cst_71 : f32 to vector<16x2xf32>
    %85 = arith.maximumf %83, %84 : vector<16x2xf32>
    %c0_72 = arith.constant 0 : index
    %c0_73 = arith.constant 0 : index
    %86 = vector.load %arg7[%c0_72, %c0_73] : memref<1x16xf32, #tpu.memory_space<vmem>>, vector<1x16xf32>
    %cst_74 = arith.constant dense<0.000000e+00> : vector<1x2xf32>
    %87 = tpu.matmul %86, %85, %cst_74 {dimension_numbers = #tpu.dot_dimension_numbers<[1], [0], [0], [1], [0, 0, 1, 1], [], []>} : vector<1x16xf32>, vector<16x2xf32>, vector<1x2xf32> -> vector<1x2xf32>
    %c0_75 = arith.constant 0 : index
    %c0_76 = arith.constant 0 : index
    %88 = vector.load %arg8[%c0_75, %c0_76] : memref<1x1xf32, #tpu.memory_space<vmem>>, vector<1x1xf32>
    %89 = vector.broadcast %88 : vector<1x1xf32> to vector<1x2xf32>
    %90 = arith.addf %87, %89 : vector<1x2xf32>
    %91 = arith.addf %69, %90 : vector<1x2xf32>
    %c0_77 = arith.constant 0 : index
    %c0_78 = arith.constant 0 : index
    %92 = vector.load %arg16[%c0_77, %c0_78] : memref<1x2xf32, #tpu.memory_space<vmem>>, vector<1x2xf32>
    %93 = arith.addf %92, %91 : vector<1x2xf32>
    %c0_79 = arith.constant 0 : index
    %c0_80 = arith.constant 0 : index
    %94 = vector.load %arg16[%c0_79, %c0_80] : memref<1x2xf32, #tpu.memory_space<vmem>>, vector<1x2xf32>
    tpu.vector_store %arg16[%c0_79, %c0_80], %93 {strides = array<i32>} : memref<1x2xf32, #tpu.memory_space<vmem>>, vector<1x2xf32>,
    %c1_i32 = arith.constant 1 : i32
    %95 = arith.cmpi eq, %arg1, %c1_i32 : i32
    %96 = arith.extui %95 : i1 to i32
    %c0_i32_81 = arith.constant 0 : i32
    %97 = arith.cmpi ne, %96, %c0_i32_81 : i32
    scf.if %97 {
      %c0_82 = arith.constant 0 : index
      %c0_83 = arith.constant 0 : index
      %98 = vector.load %arg16[%c0_82, %c0_83] : memref<1x2xf32, #tpu.memory_space<vmem>>, vector<1x2xf32>
      %cst_84 = arith.constant 1.250000e-01 : f32
      %99 = vector.broadcast %cst_84 : f32 to vector<1x2xf32>
      %100 = arith.mulf %98, %99 : vector<1x2xf32>
      %c0_85 = arith.constant 0 : index
      %c0_86 = arith.constant 0 : index
      %101 = vector.load %arg9[%c0_85, %c0_86] : memref<16x1xf32, #tpu.memory_space<vmem>>, vector<16x1xf32>
      %cst_87 = arith.constant dense<0.000000e+00> : vector<16x2xf32>
      %102 = tpu.matmul %101, %100, %cst_87 {dimension_numbers = #tpu.dot_dimension_numbers<[1], [0], [0], [1], [0, 0, 1, 1], [], []>} : vector<16x1xf32>, vector<1x2xf32>, vector<16x2xf32> -> vector<16x2xf32>
      %c0_88 = arith.constant 0 : index
      %c0_89 = arith.constant 0 : index
      %103 = vector.load %arg10[%c0_88, %c0_89] : memref<16x1xf32, #tpu.memory_space<vmem>>, vector<16x1xf32>
      %104 = vector.broadcast %103 : vector<16x1xf32> to vector<16x2xf32>
      %105 = arith.addf %102, %104 : vector<16x2xf32>
      %cst_90 = arith.constant 0.000000e+00 : f32
      %106 = vector.broadcast %cst_90 : f32 to vector<16x2xf32>
      %107 = arith.maximumf %105, %106 : vector<16x2xf32>
      %c0_91 = arith.constant 0 : index
      %c0_92 = arith.constant 0 : index
      %108 = vector.load %arg11[%c0_91, %c0_92] : memref<16x16xf32, #tpu.memory_space<vmem>>, vector<16x16xf32>
      %cst_93 = arith.constant dense<0.000000e+00> : vector<16x2xf32>
      %109 = tpu.matmul %108, %107, %cst_93 {dimension_numbers = #tpu.dot_dimension_numbers<[1], [0], [0], [1], [0, 0, 1, 1], [], []>} : vector<16x16xf32>, vector<16x2xf32>, vector<16x2xf32> -> vector<16x2xf32>
      %c0_94 = arith.constant 0 : index
      %c0_95 = arith.constant 0 : index
      %110 = vector.load %arg12[%c0_94, %c0_95] : memref<16x1xf32, #tpu.memory_space<vmem>>, vector<16x1xf32>
      %111 = vector.broadcast %110 : vector<16x1xf32> to vector<16x2xf32>
      %112 = arith.addf %109, %111 : vector<16x2xf32>
      %cst_96 = arith.constant 0.000000e+00 : f32
      %113 = vector.broadcast %cst_96 : f32 to vector<16x2xf32>
      %114 = arith.maximumf %112, %113 : vector<16x2xf32>
      %c0_97 = arith.constant 0 : index
      %c0_98 = arith.constant 0 : index
      %115 = vector.load %arg13[%c0_97, %c0_98] : memref<1x16xf32, #tpu.memory_space<vmem>>, vector<1x16xf32>
      %cst_99 = arith.constant dense<0.000000e+00> : vector<1x2xf32>
      %116 = tpu.matmul %115, %114, %cst_99 {dimension_numbers = #tpu.dot_dimension_numbers<[1], [0], [0], [1], [0, 0, 1, 1], [], []>} : vector<1x16xf32>, vector<16x2xf32>, vector<1x2xf32> -> vector<1x2xf32>
      %c0_100 = arith.constant 0 : index
      %c0_101 = arith.constant 0 : index
      %117 = vector.load %arg14[%c0_100, %c0_101] : memref<1x1xf32, #tpu.memory_space<vmem>>, vector<1x1xf32>
      %118 = vector.broadcast %117 : vector<1x1xf32> to vector<1x2xf32>
      %119 = arith.addf %116, %118 : vector<1x2xf32>
      %c0_102 = arith.constant 0 : index
      %c0_103 = arith.constant 0 : index
      %120 = vector.load %arg15[%c0_102, %c0_103] : memref<1x2xf32, #tpu.memory_space<vmem>>, vector<1x2xf32>
      tpu.vector_store %arg15[%c0_102, %c0_103], %119 {strides = array<i32>} : memref<1x2xf32, #tpu.memory_space<vmem>>, vector<1x2xf32>,
    } else {
    }
    return
  }
  func.func @transform_0(%arg0: i32, %arg1: i32) -> (i32, i32, i32) {
    %c0_i32 = arith.constant 0 : i32
    %c0_i32_0 = arith.constant 0 : i32
    return %arg1, %c0_i32, %arg0 : i32, i32, i32
  }
  func.func @transform_1(%arg0: i32, %arg1: i32) -> (i32, i32) {
    %c0_i32 = arith.constant 0 : i32
    %c0_i32_0 = arith.constant 0 : i32
    %c0_i32_1 = arith.constant 0 : i32
    return %c0_i32, %c0_i32_0 : i32, i32
  }
  func.func @transform_2(%arg0: i32, %arg1: i32) -> (i32, i32) {
    %c0_i32 = arith.constant 0 : i32
    %c0_i32_0 = arith.constant 0 : i32
    %c0_i32_1 = arith.constant 0 : i32
    return %c0_i32, %c0_i32_0 : i32, i32
  }
  func.func @transform_3(%arg0: i32, %arg1: i32) -> (i32, i32) {
    %c0_i32 = arith.constant 0 : i32
    %c0_i32_0 = arith.constant 0 : i32
    %c0_i32_1 = arith.constant 0 : i32
    return %c0_i32, %c0_i32_0 : i32, i32
  }
  func.func @transform_4(%arg0: i32, %arg1: i32) -> (i32, i32) {
    %c0_i32 = arith.constant 0 : i32
    %c0_i32_0 = arith.constant 0 : i32
    %c0_i32_1 = arith.constant 0 : i32
    return %c0_i32, %c0_i32_0 : i32, i32
  }
  func.func @transform_5(%arg0: i32, %arg1: i32) -> (i32, i32) {
    %c0_i32 = arith.constant 0 : i32
    %c0_i32_0 = arith.constant 0 : i32
    %c0_i32_1 = arith.constant 0 : i32
    return %c0_i32, %c0_i32_0 : i32, i32
  }
  func.func @transform_6(%arg0: i32, %arg1: i32) -> (i32, i32) {
    %c0_i32 = arith.constant 0 : i32
    %c0_i32_0 = arith.constant 0 : i32
    %c0_i32_1 = arith.constant 0 : i32
    return %c0_i32, %c0_i32_0 : i32, i32
  }
  func.func @transform_7(%arg0: i32, %arg1: i32) -> (i32, i32) {
    %c0_i32 = arith.constant 0 : i32
    %c0_i32_0 = arith.constant 0 : i32
    %c0_i32_1 = arith.constant 0 : i32
    return %c0_i32, %c0_i32_0 : i32, i32
  }
  func.func @transform_8(%arg0: i32, %arg1: i32) -> (i32, i32) {
    %c0_i32 = arith.constant 0 : i32
    %c0_i32_0 = arith.constant 0 : i32
    %c0_i32_1 = arith.constant 0 : i32
    return %c0_i32, %c0_i32_0 : i32, i32
  }
  func.func @transform_9(%arg0: i32, %arg1: i32) -> (i32, i32) {
    %c0_i32 = arith.constant 0 : i32
    %c0_i32_0 = arith.constant 0 : i32
    %c0_i32_1 = arith.constant 0 : i32
    return %c0_i32, %c0_i32_0 : i32, i32
  }
  func.func @transform_10(%arg0: i32, %arg1: i32) -> (i32, i32) {
    %c0_i32 = arith.constant 0 : i32
    %c0_i32_0 = arith.constant 0 : i32
    %c0_i32_1 = arith.constant 0 : i32
    return %c0_i32, %c0_i32_0 : i32, i32
  }
  func.func @transform_11(%arg0: i32, %arg1: i32) -> (i32, i32) {
    %c0_i32 = arith.constant 0 : i32
    %c0_i32_0 = arith.constant 0 : i32
    %c0_i32_1 = arith.constant 0 : i32
    return %c0_i32, %c0_i32_0 : i32, i32
  }
  func.func @transform_12(%arg0: i32, %arg1: i32) -> (i32, i32) {
    %c0_i32 = arith.constant 0 : i32
    %c0_i32_0 = arith.constant 0 : i32
    %c0_i32_1 = arith.constant 0 : i32
    return %c0_i32, %c0_i32_0 : i32, i32
  }
  func.func @transform_13(%arg0: i32, %arg1: i32) -> (i32, i32) {
    %c0_i32 = arith.constant 0 : i32
    %c0_i32_0 = arith.constant 0 : i32
    return %c0_i32, %arg0 : i32, i32
  }
}

</mosaic_0001>

<llo_original>
// kernel: tpu_custom_call.1
$region0: #{tpu_custom_call.1}
  #allocation0 [shape = 'u32[]', space=smem, size = 0x4, offset = 0x4, fixed_abs, tag = 'smem constant byte address 0x4 - core index']
  #allocation1 [shape = 'u32[144,128]{1,0:T(1,128)}', space=vmem, size = 0x12000, scoped, tag = 'internal scratch']
  #allocation2 [shape = 'f32[1,2]{1,0:T(1,128)}', space=vmem, size = 0x200, scoped, tag = 'scratch operand']
  #allocation3 [shape = 'f32[1,1]{1,0:T(1,128)S(1)}', space=vmem, size = 0x200, scoped, tag = 'scoped memory for tpu_custom_call.1']
  #allocation4 [shape = 'f32[1,1]{1,0:T(1,128)S(1)}', space=vmem, size = 0x200, scoped, tag = 'scoped memory for tpu_custom_call.1']
  %s0 = inlined_call_operand.vmem [shape: f32[8,1,2], index: 0, kind: input, shape index: {}]
  %s1 = inlined_call_operand.vmem [shape: f32[16,1], index: 1, kind: input, shape index: {}]
  %s2 = inlined_call_operand.vmem [shape: f32[16,1], index: 2, kind: input, shape index: {}]
  %s3 = inlined_call_operand.vmem [shape: f32[16,16], index: 3, kind: input, shape index: {}]
  %s4 = inlined_call_operand.vmem [shape: f32[16,1], index: 4, kind: input, shape index: {}]
  %s5 = inlined_call_operand.vmem [shape: f32[1,16], index: 5, kind: input, shape index: {}]
  %s6 = inlined_call_operand.<no memory space> [shape: f32[1,1], index: 6, kind: input, shape index: {}]
  %s7 = inlined_call_operand.vmem [shape: f32[16,1], index: 7, kind: input, shape index: {}]
  %s8 = inlined_call_operand.vmem [shape: f32[16,1], index: 8, kind: input, shape index: {}]
  %s9 = inlined_call_operand.vmem [shape: f32[16,16], index: 9, kind: input, shape index: {}]
  %s10 = inlined_call_operand.vmem [shape: f32[16,1], index: 10, kind: input, shape index: {}]
  %s11 = inlined_call_operand.vmem [shape: f32[1,16], index: 11, kind: input, shape index: {}]
  %s12 = inlined_call_operand.<no memory space> [shape: f32[1,1], index: 12, kind: input, shape index: {}]
  %s13 = inlined_call_operand.hbm [shape: f32[1,2], index: 13, kind: output, shape index: {}]
  %s14 = sld [smem:[#allocation0]]
  $region93: #{tpu_custom_call.1} parent=0
    _
  %s16 = ssub.s32 1, %s14
  %s17 = scalar_select 0, %s16, %s14
  %v18 = vstv %s6
  %19 = vst [vmem:[#allocation3] sm:$0x1] %v18
  %v20 = vstv %s12
  %21 = vst [vmem:[#allocation4] sm:$0x1] %v20
  $region1: #{tpu_custom_call.1} parent=0
    #allocation5 [shape = 'u8[512]{0}', space=vmem, size = 0x400, scoped, tag = 'output window, operand 0, single buffered']
    #allocation6 [shape = 's32[2]{0}', space=sflag, size = 0x8, scoped, tag = 'scoped memory for tpu_custom_call.1']
    %22 = vsyncpa [#allocation6], 0
    loop: start=0, step=1, limit=4
    $region2: #{tpu_custom_call.1} parent=1 // loop_pre_header
      _
    $region3: #{tpu_custom_call.1} parent=1 // loop_header
      %s24 = sphi 0, %s28
      %p25 = scmp.ge.s32.totalorder %s24, 4
      %s31 = sphi 0, %s43
      %s32 = sphi 0, %s39
      %s33 = sphi 0, %s31
      %s34 = sphi 0, %s32
      %s35 = sphi 0, %s33
      %s36 = sphi 0, %s34
      %s48 = sphi 0, %s50
      %s51 = sphi 0, %s48
      %s52 = sphi 0, %s51
      %s68 = sphi 0, %s52
      %s72 = sphi 0, %s72
      %s74 = sphi 0, %s72
      %s75 = sphi 0, %s74
      %s89 = sphi 0, %s75
      %s93 = sphi 0, %s93
      %s95 = sphi 0, %s93
      %s96 = sphi 0, %s95
      %s110 = sphi 0, %s96
      %s114 = sphi 0, %s114
      %s116 = sphi 0, %s114
      %s117 = sphi 0, %s116
      %s131 = sphi 0, %s117
      %s135 = sphi 0, %s135
      %s137 = sphi 0, %s135
      %s138 = sphi 0, %s137
      %s152 = sphi 0, %s138
      %s156 = sphi 0, %s156
      %s158 = sphi 0, %s156
      %s159 = sphi 0, %s158
      %s173 = sphi 0, %s159
      %s177 = sphi 0, %s177
      %s179 = sphi 0, %s177
      %s180 = sphi 0, %s179
      %s194 = sphi 0, %s180
      %s198 = sphi 0, %s198
      %s200 = sphi 0, %s198
      %s201 = sphi 0, %s200
      %s215 = sphi 0, %s201
      %s219 = sphi 0, %s219
      %s221 = sphi 0, %s219
      %s222 = sphi 0, %s221
      %s236 = sphi 0, %s222
      %s240 = sphi 0, %s240
      %s242 = sphi 0, %s240
      %s243 = sphi 0, %s242
      %s257 = sphi 0, %s243
      %s261 = sphi 0, %s261
      %s263 = sphi 0, %s261
      %s264 = sphi 0, %s263
      %s278 = sphi 0, %s264
      %s282 = sphi 0, %s282
      %s284 = sphi 0, %s282
      %s285 = sphi 0, %s284
      %s299 = sphi 0, %s285
      %s303 = sphi 0, %s303
      %s305 = sphi 0, %s303
      %s306 = sphi 0, %s305
      %s320 = sphi 0, %s306
      %s326 = sphi 0, %s328
      %s329 = sphi 0, %s326
      %s330 = sphi 0, %s329
      %s346 = sphi 0, %s330
    $region4: #{tpu_custom_call.1} parent=1 // loop_header_branch
      %27 = sbr.rel (%p25) target = $region8
    $region5: #{tpu_custom_call.1} parent=1 // loop_body
      %s29 = ssub.s32 %s24, 1
      %s30 = ssub.s32 %s24, 2
      %s37 = sadd.s32 1, %s32
      %p38 = scmp.ge.s32.totalorder %s37, 2
      %s39 = scalar_select %p38, 0, %s37
      %s40 = sadd.s32 1, %s31
      %s41 = scalar_select %p38, %s40, %s31
      %p42 = scmp.ge.s32.totalorder %s41, 1
      %s43 = scalar_select %p42, 0, %s41
      %s44 = ssub.s32 %s32, %s39
      %s45 = ssub.s32 %s31, %s43
      %s46 = sor.u32 %s44, %s45
      %p47 = scmp.eq.s32.totalorder %s46, 0
      %s49 = sadd.s32 %s48, 1
      %s50 = scalar_select %p47, %s48, %s49
      %p53 = pneg %p47
      %p54 = scmp.eq.s32.totalorder %s24, 1
      %p55 = por %p53, %p54
      %p56 = scmp.ne.s32.totalorder %s48, %s51
      %p57 = scmp.eq.s32.totalorder %s24, 0
      %p58 = por %p56, %p57
      %p59 = scmp.ne.s32.totalorder %s48, %s51
      %p60 = scmp.eq.s32.totalorder %s29, 1
      %p61 = por %p59, %p60
      %p62 = scmp.ne.s32.totalorder %s51, %s52
      %p63 = scmp.eq.s32.totalorder %s29, 0
      %p64 = por %p62, %p63
      %p65 = scmp.ne.s32.totalorder %s51, %s52
      %p66 = scmp.eq.s32.totalorder %s30, 1
      %p67 = por %p65, %p66
      %p69 = scmp.ne.s32.totalorder %s52, %s68
      %p70 = scmp.eq.s32.totalorder %s30, 0
      %p71 = por %p69, %p70
      %s73 = sadd.s32 %s72, 1
      %p76 = scmp.eq.s32.totalorder %s24, 1
      %p77 = scmp.ne.s32.totalorder %s72, %s74
      %p78 = scmp.eq.s32.totalorder %s24, 0
      %p79 = por %p77, %p78
      %p80 = scmp.ne.s32.totalorder %s72, %s74
      %p81 = scmp.eq.s32.totalorder %s29, 1
      %p82 = por %p80, %p81
      %p83 = scmp.ne.s32.totalorder %s74, %s75
      %p84 = scmp.eq.s32.totalorder %s29, 0
      %p85 = por %p83, %p84
      %p86 = scmp.ne.s32.totalorder %s74, %s75
      %p87 = scmp.eq.s32.totalorder %s30, 1
      %p88 = por %p86, %p87
      %p90 = scmp.ne.s32.totalorder %s75, %s89
      %p91 = scmp.eq.s32.totalorder %s30, 0
      %p92 = por %p90, %p91
      %s94 = sadd.s32 %s93, 1
      %p97 = scmp.eq.s32.totalorder %s24, 1
      %p98 = scmp.ne.s32.totalorder %s93, %s95
      %p99 = scmp.eq.s32.totalorder %s24, 0
      %p100 = por %p98, %p99
      %p101 = scmp.ne.s32.totalorder %s93, %s95
      %p102 = scmp.eq.s32.totalorder %s29, 1
      %p103 = por %p101, %p102
      %p104 = scmp.ne.s32.totalorder %s95, %s96
      %p105 = scmp.eq.s32.totalorder %s29, 0
      %p106 = por %p104, %p105
      %p107 = scmp.ne.s32.totalorder %s95, %s96
      %p108 = scmp.eq.s32.totalorder %s30, 1
      %p109 = por %p107, %p108
      %p111 = scmp.ne.s32.totalorder %s96, %s110
      %p112 = scmp.eq.s32.totalorder %s30, 0
      %p113 = por %p111, %p112
      %s115 = sadd.s32 %s114, 1
      %p118 = scmp.eq.s32.totalorder %s24, 1
      %p119 = scmp.ne.s32.totalorder %s114, %s116
      %p120 = scmp.eq.s32.totalorder %s24, 0
      %p121 = por %p119, %p120
      %p122 = scmp.ne.s32.totalorder %s114, %s116
      %p123 = scmp.eq.s32.totalorder %s29, 1
      %p124 = por %p122, %p123
      %p125 = scmp.ne.s32.totalorder %s116, %s117
      %p126 = scmp.eq.s32.totalorder %s29, 0
      %p127 = por %p125, %p126
      %p128 = scmp.ne.s32.totalorder %s116, %s117
      %p129 = scmp.eq.s32.totalorder %s30, 1
      %p130 = por %p128, %p129
      %p132 = scmp.ne.s32.totalorder %s117, %s131
      %p133 = scmp.eq.s32.totalorder %s30, 0
      %p134 = por %p132, %p133
      %s136 = sadd.s32 %s135, 1
      %p139 = scmp.eq.s32.totalorder %s24, 1
      %p140 = scmp.ne.s32.totalorder %s135, %s137
      %p141 = scmp.eq.s32.totalorder %s24, 0
      %p142 = por %p140, %p141
      %p143 = scmp.ne.s32.totalorder %s135, %s137
      %p144 = scmp.eq.s32.totalorder %s29, 1
      %p145 = por %p143, %p144
      %p146 = scmp.ne.s32.totalorder %s137, %s138
      %p147 = scmp.eq.s32.totalorder %s29, 0
      %p148 = por %p146, %p147
      %p149 = scmp.ne.s32.totalorder %s137, %s138
      %p150 = scmp.eq.s32.totalorder %s30, 1
      %p151 = por %p149, %p150
      %p153 = scmp.ne.s32.totalorder %s138, %s152
      %p154 = scmp.eq.s32.totalorder %s30, 0
      %p155 = por %p153, %p154
      %s157 = sadd.s32 %s156, 1
      %p160 = scmp.eq.s32.totalorder %s24, 1
      %p161 = scmp.ne.s32.totalorder %s156, %s158
      %p162 = scmp.eq.s32.totalorder %s24, 0
      %p163 = por %p161, %p162
      %p164 = scmp.ne.s32.totalorder %s156, %s158
      %p165 = scmp.eq.s32.totalorder %s29, 1
      %p166 = por %p164, %p165
      %p167 = scmp.ne.s32.totalorder %s158, %s159
      %p168 = scmp.eq.s32.totalorder %s29, 0
      %p169 = por %p167, %p168
      %p170 = scmp.ne.s32.totalorder %s158, %s159
      %p171 = scmp.eq.s32.totalorder %s30, 1
      %p172 = por %p170, %p171
      %p174 = scmp.ne.s32.totalorder %s159, %s173
      %p175 = scmp.eq.s32.totalorder %s30, 0
      %p176 = por %p174, %p175
      %s178 = sadd.s32 %s177, 1
      %p181 = scmp.eq.s32.totalorder %s24, 1
      %p182 = scmp.ne.s32.totalorder %s177, %s179
      %p183 = scmp.eq.s32.totalorder %s24, 0
      %p184 = por %p182, %p183
      %p185 = scmp.ne.s32.totalorder %s177, %s179
      %p186 = scmp.eq.s32.totalorder %s29, 1
      %p187 = por %p185, %p186
      %p188 = scmp.ne.s32.totalorder %s179, %s180
      %p189 = scmp.eq.s32.totalorder %s29, 0
      %p190 = por %p188, %p189
      %p191 = scmp.ne.s32.totalorder %s179, %s180
      %p192 = scmp.eq.s32.totalorder %s30, 1
      %p193 = por %p191, %p192
      %p195 = scmp.ne.s32.totalorder %s180, %s194
      %p196 = scmp.eq.s32.totalorder %s30, 0
      %p197 = por %p195, %p196
      %s199 = sadd.s32 %s198, 1
      %p202 = scmp.eq.s32.totalorder %s24, 1
      %p203 = scmp.ne.s32.totalorder %s198, %s200
      %p204 = scmp.eq.s32.totalorder %s24, 0
      %p205 = por %p203, %p204
      %p206 = scmp.ne.s32.totalorder %s198, %s200
      %p207 = scmp.eq.s32.totalorder %s29, 1
      %p208 = por %p206, %p207
      %p209 = scmp.ne.s32.totalorder %s200, %s201
      %p210 = scmp.eq.s32.totalorder %s29, 0
      %p211 = por %p209, %p210
      %p212 = scmp.ne.s32.totalorder %s200, %s201
      %p213 = scmp.eq.s32.totalorder %s30, 1
      %p214 = por %p212, %p213
      %p216 = scmp.ne.s32.totalorder %s201, %s215
      %p217 = scmp.eq.s32.totalorder %s30, 0
      %p218 = por %p216, %p217
      %s220 = sadd.s32 %s219, 1
      %p223 = scmp.eq.s32.totalorder %s24, 1
      %p224 = scmp.ne.s32.totalorder %s219, %s221
      %p225 = scmp.eq.s32.totalorder %s24, 0
      %p226 = por %p224, %p225
      %p227 = scmp.ne.s32.totalorder %s219, %s221
      %p228 = scmp.eq.s32.totalorder %s29, 1
      %p229 = por %p227, %p228
      %p230 = scmp.ne.s32.totalorder %s221, %s222
      %p231 = scmp.eq.s32.totalorder %s29, 0
      %p232 = por %p230, %p231
      %p233 = scmp.ne.s32.totalorder %s221, %s222
      %p234 = scmp.eq.s32.totalorder %s30, 1
      %p235 = por %p233, %p234
      %p237 = scmp.ne.s32.totalorder %s222, %s236
      %p238 = scmp.eq.s32.totalorder %s30, 0
      %p239 = por %p237, %p238
      %s241 = sadd.s32 %s240, 1
      %p244 = scmp.eq.s32.totalorder %s24, 1
      %p245 = scmp.ne.s32.totalorder %s240, %s242
      %p246 = scmp.eq.s32.totalorder %s24, 0
      %p247 = por %p245, %p246
      %p248 = scmp.ne.s32.totalorder %s240, %s242
      %p249 = scmp.eq.s32.totalorder %s29, 1
      %p250 = por %p248, %p249
      %p251 = scmp.ne.s32.totalorder %s242, %s243
      %p252 = scmp.eq.s32.totalorder %s29, 0
      %p253 = por %p251, %p252
      %p254 = scmp.ne.s32.totalorder %s242, %s243
      %p255 = scmp.eq.s32.totalorder %s30, 1
      %p256 = por %p254, %p255
      %p258 = scmp.ne.s32.totalorder %s243, %s257
      %p259 = scmp.eq.s32.totalorder %s30, 0
      %p260 = por %p258, %p259
      %s262 = sadd.s32 %s261, 1
      %p265 = scmp.eq.s32.totalorder %s24, 1
      %p266 = scmp.ne.s32.totalorder %s261, %s263
      %p267 = scmp.eq.s32.totalorder %s24, 0
      %p268 = por %p266, %p267
      %p269 = scmp.ne.s32.totalorder %s261, %s263
      %p270 = scmp.eq.s32.totalorder %s29, 1
      %p271 = por %p269, %p270
      %p272 = scmp.ne.s32.totalorder %s263, %s264
      %p273 = scmp.eq.s32.totalorder %s29, 0
      %p274 = por %p272, %p273
      %p275 = scmp.ne.s32.totalorder %s263, %s264
      %p276 = scmp.eq.s32.totalorder %s30, 1
      %p277 = por %p275, %p276
      %p279 = scmp.ne.s32.totalorder %s264, %s278
      %p280 = scmp.eq.s32.totalorder %s30, 0
      %p281 = por %p279, %p280
      %s283 = sadd.s32 %s282, 1
      %p286 = scmp.eq.s32.totalorder %s24, 1
      %p287 = scmp.ne.s32.totalorder %s282, %s284
      %p288 = scmp.eq.s32.totalorder %s24, 0
      %p289 = por %p287, %p288
      %p290 = scmp.ne.s32.totalorder %s282, %s284
      %p291 = scmp.eq.s32.totalorder %s29, 1
      %p292 = por %p290, %p291
      %p293 = scmp.ne.s32.totalorder %s284, %s285
      %p294 = scmp.eq.s32.totalorder %s29, 0
      %p295 = por %p293, %p294
      %p296 = scmp.ne.s32.totalorder %s284, %s285
      %p297 = scmp.eq.s32.totalorder %s30, 1
      %p298 = por %p296, %p297
      %p300 = scmp.ne.s32.totalorder %s285, %s299
      %p301 = scmp.eq.s32.totalorder %s30, 0
      %p302 = por %p300, %p301
      %s304 = sadd.s32 %s303, 1
      %p307 = scmp.eq.s32.totalorder %s24, 1
      %p308 = scmp.ne.s32.totalorder %s303, %s305
      %p309 = scmp.eq.s32.totalorder %s24, 0
      %p310 = por %p308, %p309
      %p311 = scmp.ne.s32.totalorder %s303, %s305
      %p312 = scmp.eq.s32.totalorder %s29, 1
      %p313 = por %p311, %p312
      %p314 = scmp.ne.s32.totalorder %s305, %s306
      %p315 = scmp.eq.s32.totalorder %s29, 0
      %p316 = por %p314, %p315
      %p317 = scmp.ne.s32.totalorder %s305, %s306
      %p318 = scmp.eq.s32.totalorder %s30, 1
      %p319 = por %p317, %p318
      %p321 = scmp.ne.s32.totalorder %s306, %s320
      %p322 = scmp.eq.s32.totalorder %s30, 0
      %p323 = por %p321, %p322
      %s324 = ssub.s32 %s31, %s43
      %p325 = scmp.eq.s32.totalorder %s324, 0
      %s327 = sadd.s32 %s326, 1
      %s328 = scalar_select %p325, %s326, %s327
      %p331 = pneg %p325
      %p332 = scmp.eq.s32.totalorder %s24, 1
      %p333 = por %p331, %p332
      %p334 = scmp.ne.s32.totalorder %s326, %s329
      %p335 = scmp.eq.s32.totalorder %s24, 0
      %p336 = por %p334, %p335
      %p337 = scmp.ne.s32.totalorder %s326, %s329
      %p338 = scmp.eq.s32.totalorder %s29, 1
      %p339 = por %p337, %p338
      %p340 = scmp.ne.s32.totalorder %s329, %s330
      %p341 = scmp.eq.s32.totalorder %s29, 0
      %p342 = por %p340, %p341
      %p343 = scmp.ne.s32.totalorder %s329, %s330
      %p344 = scmp.eq.s32.totalorder %s30, 1
      %p345 = por %p343, %p344
      %p347 = scmp.ne.s32.totalorder %s330, %s346
      %p348 = scmp.eq.s32.totalorder %s30, 0
      %p349 = por %p347, %p348
      %p350 = scmp.le.s32.totalorder 1, %s24
      %p351 = scmp.lt.s32.totalorder %s24, 3
      %p352 = pnand %p350, %p351
      %p353 = pneg %p352
      // Predicated region
      $region9: #{tpu_custom_call.1} parent=5 // pred_check
        _
      $region10: #{tpu_custom_call.1} parent=5 // pred_check_branch
        %355 = sbr.rel (%p352) target = $region12
      $region11: #{tpu_custom_call.1} parent=5 // pred_region
        %s356 = ssub.s32 %s24, 1
        // Predicated region
        $region13: #{tpu_custom_call.1} parent=11 // pred_check
          %p357 = pneg %p85
        $region14: #{tpu_custom_call.1} parent=11 // pred_check_branch
          %359 = sbr.rel (%p357) target = $region16
        $region15: #{tpu_custom_call.1} parent=11 // pred_region
          _
        $region16: #{tpu_custom_call.1} parent=11 // pred_fallthru
          _
        // Predicated region
        $region17: #{tpu_custom_call.1} parent=11 // pred_check
          %p360 = pneg %p106
        $region18: #{tpu_custom_call.1} parent=11 // pred_check_branch
          %362 = sbr.rel (%p360) target = $region20
        $region19: #{tpu_custom_call.1} parent=11 // pred_region
          _
        $region20: #{tpu_custom_call.1} parent=11 // pred_fallthru
          _
        // Predicated region
        $region21: #{tpu_custom_call.1} parent=11 // pred_check
          %p363 = pneg %p127
        $region22: #{tpu_custom_call.1} parent=11 // pred_check_branch
          %365 = sbr.rel (%p363) target = $region24
        $region23: #{tpu_custom_call.1} parent=11 // pred_region
          _
        $region24: #{tpu_custom_call.1} parent=11 // pred_fallthru
          _
        // Predicated region
        $region25: #{tpu_custom_call.1} parent=11 // pred_check
          %p366 = pneg %p148
        $region26: #{tpu_custom_call.1} parent=11 // pred_check_branch
          %368 = sbr.rel (%p366) target = $region28
        $region27: #{tpu_custom_call.1} parent=11 // pred_region
          _
        $region28: #{tpu_custom_call.1} parent=11 // pred_fallthru
          _
        // Predicated region
        $region29: #{tpu_custom_call.1} parent=11 // pred_check
          %p369 = pneg %p169
        $region30: #{tpu_custom_call.1} parent=11 // pred_check_branch
          %371 = sbr.rel (%p369) target = $region32
        $region31: #{tpu_custom_call.1} parent=11 // pred_region
          _
        $region32: #{tpu_custom_call.1} parent=11 // pred_fallthru
          _
        // Predicated region
        $region33: #{tpu_custom_call.1} parent=11 // pred_check
          %p372 = pneg %p190
        $region34: #{tpu_custom_call.1} parent=11 // pred_check_branch
          %374 = sbr.rel (%p372) target = $region36
        $region35: #{tpu_custom_call.1} parent=11 // pred_region
          _
        $region36: #{tpu_custom_call.1} parent=11 // pred_fallthru
          _
        // Predicated region
        $region37: #{tpu_custom_call.1} parent=11 // pred_check
          %p375 = pneg %p211
        $region38: #{tpu_custom_call.1} parent=11 // pred_check_branch
          %377 = sbr.rel (%p375) target = $region40
        $region39: #{tpu_custom_call.1} parent=11 // pred_region
          _
        $region40: #{tpu_custom_call.1} parent=11 // pred_fallthru
          _
        // Predicated region
        $region41: #{tpu_custom_call.1} parent=11 // pred_check
          %p378 = pneg %p232
        $region42: #{tpu_custom_call.1} parent=11 // pred_check_branch
          %380 = sbr.rel (%p378) target = $region44
        $region43: #{tpu_custom_call.1} parent=11 // pred_region
          _
        $region44: #{tpu_custom_call.1} parent=11 // pred_fallthru
          _
        // Predicated region
        $region45: #{tpu_custom_call.1} parent=11 // pred_check
          %p381 = pneg %p253
        $region46: #{tpu_custom_call.1} parent=11 // pred_check_branch
          %383 = sbr.rel (%p381) target = $region48
        $region47: #{tpu_custom_call.1} parent=11 // pred_region
          _
        $region48: #{tpu_custom_call.1} parent=11 // pred_fallthru
          _
        // Predicated region
        $region49: #{tpu_custom_call.1} parent=11 // pred_check
          %p384 = pneg %p274
        $region50: #{tpu_custom_call.1} parent=11 // pred_check_branch
          %386 = sbr.rel (%p384) target = $region52
        $region51: #{tpu_custom_call.1} parent=11 // pred_region
          _
        $region52: #{tpu_custom_call.1} parent=11 // pred_fallthru
          _
        // Predicated region
        $region53: #{tpu_custom_call.1} parent=11 // pred_check
          %p387 = pneg %p295
        $region54: #{tpu_custom_call.1} parent=11 // pred_check_branch
          %389 = sbr.rel (%p387) target = $region56
        $region55: #{tpu_custom_call.1} parent=11 // pred_region
          _
        $region56: #{tpu_custom_call.1} parent=11 // pred_fallthru
          _
        // Predicated region
        $region57: #{tpu_custom_call.1} parent=11 // pred_check
          %p390 = pneg %p316
        $region58: #{tpu_custom_call.1} parent=11 // pred_check_branch
          %392 = sbr.rel (%p390) target = $region60
        $region59: #{tpu_custom_call.1} parent=11 // pred_region
          _
        $region60: #{tpu_custom_call.1} parent=11 // pred_fallthru
          _
      $region12: #{tpu_custom_call.1} parent=5 // pred_fallthru
        _
      %p393 = scmp.lt.s32.totalorder %s24, 2
      // Predicated region
      $region61: #{tpu_custom_call.1} parent=5 // pred_check
        %p394 = pneg %p393
      $region62: #{tpu_custom_call.1} parent=5 // pred_check_branch
        %396 = sbr.rel (%p394) target = $region64
      $region63: #{tpu_custom_call.1} parent=5 // pred_region
        // Predicated region
        $region65: #{tpu_custom_call.1} parent=63 // pred_check
          %p397 = pneg %p58
        $region66: #{tpu_custom_call.1} parent=63 // pred_check_branch
          %399 = sbr.rel (%p397) target = $region68
        $region67: #{tpu_custom_call.1} parent=63 // pred_region
          %s400 = smul.u32 4, %s32
          %p401 = scmp.lt.s32.totalorder %s400, 7
          %s402 = scalar_select %p401, %s400, 7
          %p403 = scmp.lt.s32.totalorder %s31, 0
          %s404 = scalar_select %p403, %s31, 0
          %s405 = sadd.s32 %s404, %s402
          %s406 = scalar_lea.vmem %s0, %s405
          %s407 = smul.u32 4, %s32
        $region68: #{tpu_custom_call.1} parent=63 // pred_fallthru
          _
      $region64: #{tpu_custom_call.1} parent=5 // pred_fallthru
        _
      %p408 = scmp.le.s32.totalorder 1, %s24
      %p409 = scmp.lt.s32.totalorder %s24, 3
      %p410 = pnand %p408, %p409
      %p411 = pneg %p410
      // Predicated region
      $region69: #{tpu_custom_call.1} parent=5 // pred_check
        _
      $region70: #{tpu_custom_call.1} parent=5 // pred_check_branch
        %413 = sbr.rel (%p410) target = $region72
      $region71: #{tpu_custom_call.1} parent=5 // pred_region
        %s414 = ssub.s32 %s24, 1
        %s415 = smul.u32 4, %s34
        %p416 = scmp.lt.s32.totalorder %s415, 7
        %s417 = scalar_select %p416, %s415, 7
        %p418 = scmp.lt.s32.totalorder %s33, 0
        %s419 = scalar_select %p418, %s33, 0
        %s420 = sadd.s32 %s419, %s417
        %s421 = scalar_lea.vmem %s0, %s420
        %p422 = pneg %p64
        %p423 = pneg %p61
        %p424 = pneg %p85
        %p425 = pneg %p82
        %p426 = pneg %p106
        %p427 = pneg %p103
        %p428 = pneg %p127
        %p429 = pneg %p124
        %p430 = pneg %p148
        %p431 = pneg %p145
        %p432 = pneg %p169
        %p433 = pneg %p166
        %p434 = pneg %p190
        %p435 = pneg %p187
        %p436 = pneg %p211
        %p437 = pneg %p208
        %p438 = pneg %p232
        %p439 = pneg %p229
        %p440 = pneg %p253
        %p441 = pneg %p250
        %p442 = pneg %p274
        %p443 = pneg %p271
        %p444 = pneg %p295
        %p445 = pneg %p292
        %p446 = pneg %p316
        %p447 = pneg %p313
        %p448 = pneg %p342
        %p449 = pneg %p339
        %s450 = smul.u32 4, %s34
        %p451 = scmp.lt.s32.totalorder %s450, 7
        %s452 = scalar_select %p451, %s450, 7
        %p453 = scmp.lt.s32.totalorder %s33, 0
        %s454 = scalar_select %p453, %s33, 0
        %s455 = sadd.s32 %s454, %s452
        %s456 = scalar_lea.vmem %s0, %s455
        %s457 = smul.u32 4, %s34
        %p458 = scmp.eq.s32.totalorder %s34, 0
        // Predicated region
        $region73: #{tpu_custom_call.1} parent=71 // pred_check
          %p459 = pneg %p458
        $region74: #{tpu_custom_call.1} parent=71 // pred_check_branch
          %461 = sbr.rel (%p459) target = $region76
        $region75: #{tpu_custom_call.1} parent=71 // pred_region
          %vm462 = vcmask 8192
          %463 = vst.msk [vmem:[#allocation2] sm:$0x1] %vm462, 0.0
        $region76: #{tpu_custom_call.1} parent=71 // pred_fallthru
          _
        %v464 = vld [vmem:[%s456] sm:$0x1]
        %v465 = vld [vmem:[%s1] sm:$0xff]
        %v466 = vld [vmem:[%s1 + $0x8] sm:$0xff]
        %v467 = vld [vmem:[%s2] sm:$0xff]
        %v468 = vld [vmem:[%s2 + $0x8] sm:$0xff]
        %470 = vset.pattern.permute.xlu0 0
        %471 = vperm.xlu0 %470, %v467
        %v472 = vpop.permute.xlu0 %471
        %475 = vset.pattern.permute.xlu0 0
        %476 = vperm.xlu0 %475, %v468
        %v477 = vpop.permute.xlu0 %476
        %vm479 = vcmask 7168
        %v481 = vsel %vm479, %v465, 0
        %v484 = vsel %vm479, %v466, 0
        %vm486 = vcmask 1040384
        %v488 = vsel %vm486, %v464, 0
        %490 = vmatprep.subr.mxu0 0.0
        %491 = vmatpush1.msra.mxu0 %v488
        %492 = vmatprep.subr.mxu0 0.0
        %493 = vmatpush1.msra.mxu0 0.0
        %494 = vmatprep.subr.mxu0 0.0
        %495 = vmatpush1.msra.mxu0 0.0
        %496 = vmatprep.subr.mxu0 0.0
        %497 = vmatpush1.msra.mxu0 0.0
        %498 = vmatprep.subr.mxu0 0.0
        %499 = vmatpush1.msra.mxu0 0.0
        %500 = vmatprep.subr.mxu0 0.0
        %501 = vmatpush1.msra.mxu0 0.0
        %502 = vmatprep.subr.mxu0 0.0
        %503 = vmatpush1.msra.mxu0 0.0
        %504 = vmatprep.subr.mxu0 0.0
        %505 = vmatpush1.msra.mxu0 0.0
        %506 = vmatprep.subr.mxu0 0.0
        %507 = vmatpush1.msra.mxu0 0.0
        %508 = vmatprep.subr.mxu0 0.0
        %509 = vmatpush1.msra.mxu0 0.0
        %510 = vmatprep.subr.mxu0 0.0
        %511 = vmatpush1.msra.mxu0 0.0
        %512 = vmatprep.subr.mxu0 0.0
        %513 = vmatpush1.msra.mxu0 0.0
        %514 = vmatprep.subr.mxu0 0.0
        %515 = vmatpush1.msra.mxu0 0.0
        %516 = vmatprep.subr.mxu0 0.0
        %517 = vmatpush1.msra.mxu0 0.0
        %518 = vmatprep.subr.mxu0 0.0
        %519 = vmatpush1.msra.mxu0 0.0
        %520 = vmatprep.subr.mxu0 0.0
        %521 = vmatpush1.msra.mxu0 0.0
        %522 = vmatprep.subr.mxu0 0.0
        %523 = vmatpush1.msra.mxu0 0.0
        %524 = vmatprep.subr.mxu0 0.0
        %525 = vmatpush1.msra.mxu0 0.0
        %526 = vmatprep.subr.mxu0 0.0
        %527 = vmatpush1.msra.mxu0 0.0
        %528 = vmatprep.subr.mxu0 0.0
        %529 = vmatpush1.msra.mxu0 0.0
        %530 = vmatprep.subr.mxu0 0.0
        %531 = vmatpush1.msra.mxu0 0.0
        %532 = vmatprep.subr.mxu0 0.0
        %533 = vmatpush1.msra.mxu0 0.0
        %534 = vmatprep.subr.mxu0 0.0
        %535 = vmatpush1.msra.mxu0 0.0
        %536 = vmatprep.subr.mxu0 0.0
        %537 = vmatpush1.msra.mxu0 0.0
        %538 = vmatprep.subr.mxu0 0.0
        %539 = vmatpush1.msra.mxu0 0.0
        %540 = vmatprep.subr.mxu0 0.0
        %541 = vmatpush1.msra.mxu0 0.0
        %542 = vmatprep.subr.mxu0 0.0
        %543 = vmatpush1.msra.mxu0 0.0
        %544 = vmatprep.subr.mxu0 0.0
        %545 = vmatpush1.msra.mxu0 0.0
        %546 = vmatprep.subr.mxu0 0.0
        %547 = vmatpush1.msra.mxu0 0.0
        %548 = vmatprep.subr.mxu0 0.0
        %549 = vmatpush1.msra.mxu0 0.0
        %550 = vmatprep.subr.mxu0 0.0
        %551 = vmatpush1.msra.mxu0 0.0
        %552 = vmatprep.subr.mxu0 0.0
        %553 = vmatpush1.msra.mxu0 0.0
        %554 = vmatprep.mubr.f32.mxu0 0.0
        %555 = vmatmul.mubr.f32.gmra.mrb[0].mxu0 %v481
        %v556 = vpop.f32.mrb[0].mxu0
        %v557 = vadd.f32 %v472, %v556
        %v558 = vpop.f32.mrb[0].mxu0
        %559 = vmatprep.mubr.f32.mxu0 0.0
        %560 = vmatmul.mubr.f32.gmra.mrb[0].mxu0 %v484
        %v561 = vpop.f32.mrb[0].mxu0
        %v562 = vadd.f32 %v477, %v561
        %v563 = vpop.f32.mrb[0].mxu0
        %564 = vdwg.mxu0
        %v565 = vmax.f32 %v557, 0.0
        %v566 = vmax.f32 %v562, 0.0
        %v567 = vld [vmem:[%s3] sm:$0xff]
        %v568 = vld [vmem:[%s3 + $0x8] sm:$0xff]
        %v569 = vld [vmem:[%s4] sm:$0xff]
        %v570 = vld [vmem:[%s4 + $0x8] sm:$0xff]
        %572 = vset.pattern.permute.xlu0 0
        %573 = vperm.xlu0 %572, %v569
        %v574 = vpop.permute.xlu0 %573
        %577 = vset.pattern.permute.xlu0 0
        %578 = vperm.xlu0 %577, %v570
        %v579 = vpop.permute.xlu0 %578
        %vm581 = vcmask 130048
        %v583 = vsel %vm581, %v567, 0
        %v586 = vsel %vm581, %v568, 0
        %588 = vmatprep.subr.mxu0 0.0
        %589 = vmatpush1.msra.mxu0 %v565
        %590 = vmatprep.subr.mxu0 0.0
        %591 = vmatpush1.msra.mxu0 %v566
        %592 = vmatprep.subr.mxu0 0.0
        %593 = vmatpush1.msra.mxu0 0.0
        %594 = vmatprep.subr.mxu0 0.0
        %595 = vmatpush1.msra.mxu0 0.0
        %596 = vmatprep.subr.mxu0 0.0
        %597 = vmatpush1.msra.mxu0 0.0
        %598 = vmatprep.subr.mxu0 0.0
        %599 = vmatpush1.msra.mxu0 0.0
        %600 = vmatprep.subr.mxu0 0.0
        %601 = vmatpush1.msra.mxu0 0.0
        %602 = vmatprep.subr.mxu0 0.0
        %603 = vmatpush1.msra.mxu0 0.0
        %604 = vmatprep.subr.mxu0 0.0
        %605 = vmatpush1.msra.mxu0 0.0
        %606 = vmatprep.subr.mxu0 0.0
        %607 = vmatpush1.msra.mxu0 0.0
        %608 = vmatprep.subr.mxu0 0.0
        %609 = vmatpush1.msra.mxu0 0.0
        %610 = vmatprep.subr.mxu0 0.0
        %611 = vmatpush1.msra.mxu0 0.0
        %612 = vmatprep.subr.mxu0 0.0
        %613 = vmatpush1.msra.mxu0 0.0
        %614 = vmatprep.subr.mxu0 0.0
        %615 = vmatpush1.msra.mxu0 0.0
        %616 = vmatprep.subr.mxu0 0.0
        %617 = vmatpush1.msra.mxu0 0.0
        %618 = vmatprep.subr.mxu0 0.0
        %619 = vmatpush1.msra.mxu0 0.0
        %620 = vmatprep.subr.mxu0 0.0
        %621 = vmatpush1.msra.mxu0 0.0
        %622 = vmatprep.subr.mxu0 0.0
        %623 = vmatpush1.msra.mxu0 0.0
        %624 = vmatprep.subr.mxu0 0.0
        %625 = vmatpush1.msra.mxu0 0.0
        %626 = vmatprep.subr.mxu0 0.0
        %627 = vmatpush1.msra.mxu0 0.0
        %628 = vmatprep.subr.mxu0 0.0
        %629 = vmatpush1.msra.mxu0 0.0
        %630 = vmatprep.subr.mxu0 0.0
        %631 = vmatpush1.msra.mxu0 0.0
        %632 = vmatprep.subr.mxu0 0.0
        %633 = vmatpush1.msra.mxu0 0.0
        %634 = vmatprep.subr.mxu0 0.0
        %635 = vmatpush1.msra.mxu0 0.0
        %636 = vmatprep.subr.mxu0 0.0
        %637 = vmatpush1.msra.mxu0 0.0
        %638 = vmatprep.subr.mxu0 0.0
        %639 = vmatpush1.msra.mxu0 0.0
        %640 = vmatprep.subr.mxu0 0.0
        %641 = vmatpush1.msra.mxu0 0.0
        %642 = vmatprep.subr.mxu0 0.0
        %643 = vmatpush1.msra.mxu0 0.0
        %644 = vmatprep.subr.mxu0 0.0
        %645 = vmatpush1.msra.mxu0 0.0
        %646 = vmatprep.subr.mxu0 0.0
        %647 = vmatpush1.msra.mxu0 0.0
        %648 = vmatprep.subr.mxu0 0.0
        %649 = vmatpush1.msra.mxu0 0.0
        %650 = vmatprep.subr.mxu0 0.0
        %651 = vmatpush1.msra.mxu0 0.0
        %652 = vmatprep.mubr.f32.mxu0 0.0
        %653 = vmatmul.mubr.f32.gmra.mrb[0].mxu0 %v583
        %v654 = vpop.f32.mrb[0].mxu0
        %v655 = vadd.f32 %v574, %v654
        %v656 = vpop.f32.mrb[0].mxu0
        %657 = vmatprep.mubr.f32.mxu0 0.0
        %658 = vmatmul.mubr.f32.gmra.mrb[0].mxu0 %v586
        %v659 = vpop.f32.mrb[0].mxu0
        %v660 = vadd.f32 %v579, %v659
        %v661 = vpop.f32.mrb[0].mxu0
        %662 = vdwg.mxu0
        %v663 = vmax.f32 %v655, 0.0
        %v664 = vmax.f32 %v660, 0.0
        %v665 = vld [vmem:[%s5] sm:$0x1]
        %v666 = vld [vmem:[#allocation3] sm:$0x1]
        %668 = vset.pattern.permute.xlu0 0
        %669 = vperm.xlu0 %668, %v666
        %v670 = vpop.permute.xlu0 %669
        %v672 = vlaneseq
        %v673 = vshrl.u32 %v672, 7
        %v674 = vsub.s32 0, %v673
        %v675 = vrot.slane %v670, %v674
        %v677 = vsel %vm581, %v665, 0
        %679 = vmatprep.subr.mxu0 0.0
        %680 = vmatpush1.msra.mxu0 %v663
        %681 = vmatprep.subr.mxu0 0.0
        %682 = vmatpush1.msra.mxu0 %v664
        %683 = vmatprep.subr.mxu0 0.0
        %684 = vmatpush1.msra.mxu0 0.0
        %685 = vmatprep.subr.mxu0 0.0
        %686 = vmatpush1.msra.mxu0 0.0
        %687 = vmatprep.subr.mxu0 0.0
        %688 = vmatpush1.msra.mxu0 0.0
        %689 = vmatprep.subr.mxu0 0.0
        %690 = vmatpush1.msra.mxu0 0.0
        %691 = vmatprep.subr.mxu0 0.0
        %692 = vmatpush1.msra.mxu0 0.0
        %693 = vmatprep.subr.mxu0 0.0
        %694 = vmatpush1.msra.mxu0 0.0
        %695 = vmatprep.subr.mxu0 0.0
        %696 = vmatpush1.msra.mxu0 0.0
        %697 = vmatprep.subr.mxu0 0.0
        %698 = vmatpush1.msra.mxu0 0.0
        %699 = vmatprep.subr.mxu0 0.0
        %700 = vmatpush1.msra.mxu0 0.0
        %701 = vmatprep.subr.mxu0 0.0
        %702 = vmatpush1.msra.mxu0 0.0
        %703 = vmatprep.subr.mxu0 0.0
        %704 = vmatpush1.msra.mxu0 0.0
        %705 = vmatprep.subr.mxu0 0.0
        %706 = vmatpush1.msra.mxu0 0.0
        %707 = vmatprep.subr.mxu0 0.0
        %708 = vmatpush1.msra.mxu0 0.0
        %709 = vmatprep.subr.mxu0 0.0
        %710 = vmatpush1.msra.mxu0 0.0
        %711 = vmatprep.subr.mxu0 0.0
        %712 = vmatpush1.msra.mxu0 0.0
        %713 = vmatprep.subr.mxu0 0.0
        %714 = vmatpush1.msra.mxu0 0.0
        %715 = vmatprep.subr.mxu0 0.0
        %716 = vmatpush1.msra.mxu0 0.0
        %717 = vmatprep.subr.mxu0 0.0
        %718 = vmatpush1.msra.mxu0 0.0
        %719 = vmatprep.subr.mxu0 0.0
        %720 = vmatpush1.msra.mxu0 0.0
        %721 = vmatprep.subr.mxu0 0.0
        %722 = vmatpush1.msra.mxu0 0.0
        %723 = vmatprep.subr.mxu0 0.0
        %724 = vmatpush1.msra.mxu0 0.0
        %725 = vmatprep.subr.mxu0 0.0
        %726 = vmatpush1.msra.mxu0 0.0
        %727 = vmatprep.subr.mxu0 0.0
        %728 = vmatpush1.msra.mxu0 0.0
        %729 = vmatprep.subr.mxu0 0.0
        %730 = vmatpush1.msra.mxu0 0.0
        %731 = vmatprep.subr.mxu0 0.0
        %732 = vmatpush1.msra.mxu0 0.0
        %733 = vmatprep.subr.mxu0 0.0
        %734 = vmatpush1.msra.mxu0 0.0
        %735 = vmatprep.subr.mxu0 0.0
        %736 = vmatpush1.msra.mxu0 0.0
        %737 = vmatprep.subr.mxu0 0.0
        %738 = vmatpush1.msra.mxu0 0.0
        %739 = vmatprep.subr.mxu0 0.0
        %740 = vmatpush1.msra.mxu0 0.0
        %741 = vmatprep.subr.mxu0 0.0
        %742 = vmatpush1.msra.mxu0 0.0
        %743 = vmatprep.mubr.f32.mxu0 0.0
        %744 = vmatmul.mubr.f32.gmra.mrb[0].mxu0 %v677
        %v745 = vpop.f32.mrb[0].mxu0
        %v746 = vadd.f32 %v675, %v745
        %v747 = vpop.f32.mrb[0].mxu0
        %748 = vdwg.mxu0
        %v749 = vadd.f32 %v746, 0.0
        %s750 = scalar_lea.vmem %s456, 1
        %v751 = vld [vmem:[%s750] sm:$0x1]
        %v753 = vsel %vm486, %v751, 0
        %755 = vmatprep.subr.mxu0 0.0
        %756 = vmatpush1.msra.mxu0 %v753
        %757 = vmatprep.subr.mxu0 0.0
        %758 = vmatpush1.msra.mxu0 0.0
        %759 = vmatprep.subr.mxu0 0.0
        %760 = vmatpush1.msra.mxu0 0.0
        %761 = vmatprep.subr.mxu0 0.0
        %762 = vmatpush1.msra.mxu0 0.0
        %763 = vmatprep.subr.mxu0 0.0
        %764 = vmatpush1.msra.mxu0 0.0
        %765 = vmatprep.subr.mxu0 0.0
        %766 = vmatpush1.msra.mxu0 0.0
        %767 = vmatprep.subr.mxu0 0.0
        %768 = vmatpush1.msra.mxu0 0.0
        %769 = vmatprep.subr.mxu0 0.0
        %770 = vmatpush1.msra.mxu0 0.0
        %771 = vmatprep.subr.mxu0 0.0
        %772 = vmatpush1.msra.mxu0 0.0
        %773 = vmatprep.subr.mxu0 0.0
        %774 = vmatpush1.msra.mxu0 0.0
        %775 = vmatprep.subr.mxu0 0.0
        %776 = vmatpush1.msra.mxu0 0.0
        %777 = vmatprep.subr.mxu0 0.0
        %778 = vmatpush1.msra.mxu0 0.0
        %779 = vmatprep.subr.mxu0 0.0
        %780 = vmatpush1.msra.mxu0 0.0
        %781 = vmatprep.subr.mxu0 0.0
        %782 = vmatpush1.msra.mxu0 0.0
        %783 = vmatprep.subr.mxu0 0.0
        %784 = vmatpush1.msra.mxu0 0.0
        %785 = vmatprep.subr.mxu0 0.0
        %786 = vmatpush1.msra.mxu0 0.0
        %787 = vmatprep.subr.mxu0 0.0
        %788 = vmatpush1.msra.mxu0 0.0
        %789 = vmatprep.subr.mxu0 0.0
        %790 = vmatpush1.msra.mxu0 0.0
        %791 = vmatprep.subr.mxu0 0.0
        %792 = vmatpush1.msra.mxu0 0.0
        %793 = vmatprep.subr.mxu0 0.0
        %794 = vmatpush1.msra.mxu0 0.0
        %795 = vmatprep.subr.mxu0 0.0
        %796 = vmatpush1.msra.mxu0 0.0
        %797 = vmatprep.subr.mxu0 0.0
        %798 = vmatpush1.msra.mxu0 0.0
        %799 = vmatprep.subr.mxu0 0.0
        %800 = vmatpush1.msra.mxu0 0.0
        %801 = vmatprep.subr.mxu0 0.0
        %802 = vmatpush1.msra.mxu0 0.0
        %803 = vmatprep.subr.mxu0 0.0
        %804 = vmatpush1.msra.mxu0 0.0
        %805 = vmatprep.subr.mxu0 0.0
        %806 = vmatpush1.msra.mxu0 0.0
        %807 = vmatprep.subr.mxu0 0.0
        %808 = vmatpush1.msra.mxu0 0.0
        %809 = vmatprep.subr.mxu0 0.0
        %810 = vmatpush1.msra.mxu0 0.0
        %811 = vmatprep.subr.mxu0 0.0
        %812 = vmatpush1.msra.mxu0 0.0
        %813 = vmatprep.subr.mxu0 0.0
        %814 = vmatpush1.msra.mxu0 0.0
        %815 = vmatprep.subr.mxu0 0.0
        %816 = vmatpush1.msra.mxu0 0.0
        %817 = vmatprep.subr.mxu0 0.0
        %818 = vmatpush1.msra.mxu0 0.0
        %819 = vmatprep.mubr.f32.mxu0 0.0
        %820 = vmatmul.mubr.f32.gmra.mrb[0].mxu0 %v481
        %v821 = vpop.f32.mrb[0].mxu0
        %v822 = vadd.f32 %v472, %v821
        %v823 = vpop.f32.mrb[0].mxu0
        %824 = vmatprep.mubr.f32.mxu0 0.0
        %825 = vmatmul.mubr.f32.gmra.mrb[0].mxu0 %v484
        %v826 = vpop.f32.mrb[0].mxu0
        %v827 = vadd.f32 %v477, %v826
        %v828 = vpop.f32.mrb[0].mxu0
        %829 = vdwg.mxu0
        %v830 = vmax.f32 %v822, 0.0
        %v831 = vmax.f32 %v827, 0.0
        %832 = vmatprep.subr.mxu0 0.0
        %833 = vmatpush1.msra.mxu0 %v830
        %834 = vmatprep.subr.mxu0 0.0
        %835 = vmatpush1.msra.mxu0 %v831
        %836 = vmatprep.subr.mxu0 0.0
        %837 = vmatpush1.msra.mxu0 0.0
        %838 = vmatprep.subr.mxu0 0.0
        %839 = vmatpush1.msra.mxu0 0.0
        %840 = vmatprep.subr.mxu0 0.0
        %841 = vmatpush1.msra.mxu0 0.0
        %842 = vmatprep.subr.mxu0 0.0
        %843 = vmatpush1.msra.mxu0 0.0
        %844 = vmatprep.subr.mxu0 0.0
        %845 = vmatpush1.msra.mxu0 0.0
        %846 = vmatprep.subr.mxu0 0.0
        %847 = vmatpush1.msra.mxu0 0.0
        %848 = vmatprep.subr.mxu0 0.0
        %849 = vmatpush1.msra.mxu0 0.0
        %850 = vmatprep.subr.mxu0 0.0
        %851 = vmatpush1.msra.mxu0 0.0
        %852 = vmatprep.subr.mxu0 0.0
        %853 = vmatpush1.msra.mxu0 0.0
        %854 = vmatprep.subr.mxu0 0.0
        %855 = vmatpush1.msra.mxu0 0.0
        %856 = vmatprep.subr.mxu0 0.0
        %857 = vmatpush1.msra.mxu0 0.0
        %858 = vmatprep.subr.mxu0 0.0
        %859 = vmatpush1.msra.mxu0 0.0
        %860 = vmatprep.subr.mxu0 0.0
        %861 = vmatpush1.msra.mxu0 0.0
        %862 = vmatprep.subr.mxu0 0.0
        %863 = vmatpush1.msra.mxu0 0.0
        %864 = vmatprep.subr.mxu0 0.0
        %865 = vmatpush1.msra.mxu0 0.0
        %866 = vmatprep.subr.mxu0 0.0
        %867 = vmatpush1.msra.mxu0 0.0
        %868 = vmatprep.subr.mxu0 0.0
        %869 = vmatpush1.msra.mxu0 0.0
        %870 = vmatprep.subr.mxu0 0.0
        %871 = vmatpush1.msra.mxu0 0.0
        %872 = vmatprep.subr.mxu0 0.0
        %873 = vmatpush1.msra.mxu0 0.0
        %874 = vmatprep.subr.mxu0 0.0
        %875 = vmatpush1.msra.mxu0 0.0
        %876 = vmatprep.subr.mxu0 0.0
        %877 = vmatpush1.msra.mxu0 0.0
        %878 = vmatprep.subr.mxu0 0.0
        %879 = vmatpush1.msra.mxu0 0.0
        %880 = vmatprep.subr.mxu0 0.0
        %881 = vmatpush1.msra.mxu0 0.0
        %882 = vmatprep.subr.mxu0 0.0
        %883 = vmatpush1.msra.mxu0 0.0
        %884 = vmatprep.subr.mxu0 0.0
        %885 = vmatpush1.msra.mxu0 0.0
        %886 = vmatprep.subr.mxu0 0.0
        %887 = vmatpush1.msra.mxu0 0.0
        %888 = vmatprep.subr.mxu0 0.0
        %889 = vmatpush1.msra.mxu0 0.0
        %890 = vmatprep.subr.mxu0 0.0
        %891 = vmatpush1.msra.mxu0 0.0
        %892 = vmatprep.subr.mxu0 0.0
        %893 = vmatpush1.msra.mxu0 0.0
        %894 = vmatprep.subr.mxu0 0.0
        %895 = vmatpush1.msra.mxu0 0.0
        %896 = vmatprep.mubr.f32.mxu0 0.0
        %897 = vmatmul.mubr.f32.gmra.mrb[0].mxu0 %v583
        %v898 = vpop.f32.mrb[0].mxu0
        %v899 = vadd.f32 %v574, %v898
        %v900 = vpop.f32.mrb[0].mxu0
        %901 = vmatprep.mubr.f32.mxu0 0.0
        %902 = vmatmul.mubr.f32.gmra.mrb[0].mxu0 %v586
        %v903 = vpop.f32.mrb[0].mxu0
        %v904 = vadd.f32 %v579, %v903
        %v905 = vpop.f32.mrb[0].mxu0
        %906 = vdwg.mxu0
        %v907 = vmax.f32 %v899, 0.0
        %v908 = vmax.f32 %v904, 0.0
        %909 = vmatprep.subr.mxu0 0.0
        %910 = vmatpush1.msra.mxu0 %v907
        %911 = vmatprep.subr.mxu0 0.0
        %912 = vmatpush1.msra.mxu0 %v908
        %913 = vmatprep.subr.mxu0 0.0
        %914 = vmatpush1.msra.mxu0 0.0
        %915 = vmatprep.subr.mxu0 0.0
        %916 = vmatpush1.msra.mxu0 0.0
        %917 = vmatprep.subr.mxu0 0.0
        %918 = vmatpush1.msra.mxu0 0.0
        %919 = vmatprep.subr.mxu0 0.0
        %920 = vmatpush1.msra.mxu0 0.0
        %921 = vmatprep.subr.mxu0 0.0
        %922 = vmatpush1.msra.mxu0 0.0
        %923 = vmatprep.subr.mxu0 0.0
        %924 = vmatpush1.msra.mxu0 0.0
        %925 = vmatprep.subr.mxu0 0.0
        %926 = vmatpush1.msra.mxu0 0.0
        %927 = vmatprep.subr.mxu0 0.0
        %928 = vmatpush1.msra.mxu0 0.0
        %929 = vmatprep.subr.mxu0 0.0
        %930 = vmatpush1.msra.mxu0 0.0
        %931 = vmatprep.subr.mxu0 0.0
        %932 = vmatpush1.msra.mxu0 0.0
        %933 = vmatprep.subr.mxu0 0.0
        %934 = vmatpush1.msra.mxu0 0.0
        %935 = vmatprep.subr.mxu0 0.0
        %936 = vmatpush1.msra.mxu0 0.0
        %937 = vmatprep.subr.mxu0 0.0
        %938 = vmatpush1.msra.mxu0 0.0
        %939 = vmatprep.subr.mxu0 0.0
        %940 = vmatpush1.msra.mxu0 0.0
        %941 = vmatprep.subr.mxu0 0.0
        %942 = vmatpush1.msra.mxu0 0.0
        %943 = vmatprep.subr.mxu0 0.0
        %944 = vmatpush1.msra.mxu0 0.0
        %945 = vmatprep.subr.mxu0 0.0
        %946 = vmatpush1.msra.mxu0 0.0
        %947 = vmatprep.subr.mxu0 0.0
        %948 = vmatpush1.msra.mxu0 0.0
        %949 = vmatprep.subr.mxu0 0.0
        %950 = vmatpush1.msra.mxu0 0.0
        %951 = vmatprep.subr.mxu0 0.0
        %952 = vmatpush1.msra.mxu0 0.0
        %953 = vmatprep.subr.mxu0 0.0
        %954 = vmatpush1.msra.mxu0 0.0
        %955 = vmatprep.subr.mxu0 0.0
        %956 = vmatpush1.msra.mxu0 0.0
        %957 = vmatprep.subr.mxu0 0.0
        %958 = vmatpush1.msra.mxu0 0.0
        %959 = vmatprep.subr.mxu0 0.0
        %960 = vmatpush1.msra.mxu0 0.0
        %961 = vmatprep.subr.mxu0 0.0
        %962 = vmatpush1.msra.mxu0 0.0
        %963 = vmatprep.subr.mxu0 0.0
        %964 = vmatpush1.msra.mxu0 0.0
        %965 = vmatprep.subr.mxu0 0.0
        %966 = vmatpush1.msra.mxu0 0.0
        %967 = vmatprep.subr.mxu0 0.0
        %968 = vmatpush1.msra.mxu0 0.0
        %969 = vmatprep.subr.mxu0 0.0
        %970 = vmatpush1.msra.mxu0 0.0
        %971 = vmatprep.subr.mxu0 0.0
        %972 = vmatpush1.msra.mxu0 0.0
        %973 = vmatprep.mubr.f32.mxu0 0.0
        %974 = vmatmul.mubr.f32.gmra.mrb[0].mxu0 %v677
        %v975 = vpop.f32.mrb[0].mxu0
        %v976 = vadd.f32 %v675, %v975
        %v977 = vpop.f32.mrb[0].mxu0
        %978 = vdwg.mxu0
        %v979 = vadd.f32 %v749, %v976
        %s980 = scalar_lea.vmem %s456, 2
        %v981 = vld [vmem:[%s980] sm:$0x1]
        %v983 = vsel %vm486, %v981, 0
        %985 = vmatprep.subr.mxu0 0.0
        %986 = vmatpush1.msra.mxu0 %v983
        %987 = vmatprep.subr.mxu0 0.0
        %988 = vmatpush1.msra.mxu0 0.0
        %989 = vmatprep.subr.mxu0 0.0
        %990 = vmatpush1.msra.mxu0 0.0
        %991 = vmatprep.subr.mxu0 0.0
        %992 = vmatpush1.msra.mxu0 0.0
        %993 = vmatprep.subr.mxu0 0.0
        %994 = vmatpush1.msra.mxu0 0.0
        %995 = vmatprep.subr.mxu0 0.0
        %996 = vmatpush1.msra.mxu0 0.0
        %997 = vmatprep.subr.mxu0 0.0
        %998 = vmatpush1.msra.mxu0 0.0
        %999 = vmatprep.subr.mxu0 0.0
        %1000 = vmatpush1.msra.mxu0 0.0
        %1001 = vmatprep.subr.mxu0 0.0
        %1002 = vmatpush1.msra.mxu0 0.0
        %1003 = vmatprep.subr.mxu0 0.0
        %1004 = vmatpush1.msra.mxu0 0.0
        %1005 = vmatprep.subr.mxu0 0.0
        %1006 = vmatpush1.msra.mxu0 0.0
        %1007 = vmatprep.subr.mxu0 0.0
        %1008 = vmatpush1.msra.mxu0 0.0
        %1009 = vmatprep.subr.mxu0 0.0
        %1010 = vmatpush1.msra.mxu0 0.0
        %1011 = vmatprep.subr.mxu0 0.0
        %1012 = vmatpush1.msra.mxu0 0.0
        %1013 = vmatprep.subr.mxu0 0.0
        %1014 = vmatpush1.msra.mxu0 0.0
        %1015 = vmatprep.subr.mxu0 0.0
        %1016 = vmatpush1.msra.mxu0 0.0
        %1017 = vmatprep.subr.mxu0 0.0
        %1018 = vmatpush1.msra.mxu0 0.0
        %1019 = vmatprep.subr.mxu0 0.0
        %1020 = vmatpush1.msra.mxu0 0.0
        %1021 = vmatprep.subr.mxu0 0.0
        %1022 = vmatpush1.msra.mxu0 0.0
        %1023 = vmatprep.subr.mxu0 0.0
        %1024 = vmatpush1.msra.mxu0 0.0
        %1025 = vmatprep.subr.mxu0 0.0
        %1026 = vmatpush1.msra.mxu0 0.0
        %1027 = vmatprep.subr.mxu0 0.0
        %1028 = vmatpush1.msra.mxu0 0.0
        %1029 = vmatprep.subr.mxu0 0.0
        %1030 = vmatpush1.msra.mxu0 0.0
        %1031 = vmatprep.subr.mxu0 0.0
        %1032 = vmatpush1.msra.mxu0 0.0
        %1033 = vmatprep.subr.mxu0 0.0
        %1034 = vmatpush1.msra.mxu0 0.0
        %1035 = vmatprep.subr.mxu0 0.0
        %1036 = vmatpush1.msra.mxu0 0.0
        %1037 = vmatprep.subr.mxu0 0.0
        %1038 = vmatpush1.msra.mxu0 0.0
        %1039 = vmatprep.subr.mxu0 0.0
        %1040 = vmatpush1.msra.mxu0 0.0
        %1041 = vmatprep.subr.mxu0 0.0
        %1042 = vmatpush1.msra.mxu0 0.0
        %1043 = vmatprep.subr.mxu0 0.0
        %1044 = vmatpush1.msra.mxu0 0.0
        %1045 = vmatprep.subr.mxu0 0.0
        %1046 = vmatpush1.msra.mxu0 0.0
        %1047 = vmatprep.subr.mxu0 0.0
        %1048 = vmatpush1.msra.mxu0 0.0
        %1049 = vmatprep.mubr.f32.mxu0 0.0
        %1050 = vmatmul.mubr.f32.gmra.mrb[0].mxu0 %v481
        %v1051 = vpop.f32.mrb[0].mxu0
        %v1052 = vadd.f32 %v472, %v1051
        %v1053 = vpop.f32.mrb[0].mxu0
        %1054 = vmatprep.mubr.f32.mxu0 0.0
        %1055 = vmatmul.mubr.f32.gmra.mrb[0].mxu0 %v484
        %v1056 = vpop.f32.mrb[0].mxu0
        %v1057 = vadd.f32 %v477, %v1056
        %v1058 = vpop.f32.mrb[0].mxu0
        %1059 = vdwg.mxu0
        %v1060 = vmax.f32 %v1052, 0.0
        %v1061 = vmax.f32 %v1057, 0.0
        %1062 = vmatprep.subr.mxu0 0.0
        %1063 = vmatpush1.msra.mxu0 %v1060
        %1064 = vmatprep.subr.mxu0 0.0
        %1065 = vmatpush1.msra.mxu0 %v1061
        %1066 = vmatprep.subr.mxu0 0.0
        %1067 = vmatpush1.msra.mxu0 0.0
        %1068 = vmatprep.subr.mxu0 0.0
        %1069 = vmatpush1.msra.mxu0 0.0
        %1070 = vmatprep.subr.mxu0 0.0
        %1071 = vmatpush1.msra.mxu0 0.0
        %1072 = vmatprep.subr.mxu0 0.0
        %1073 = vmatpush1.msra.mxu0 0.0
        %1074 = vmatprep.subr.mxu0 0.0
        %1075 = vmatpush1.msra.mxu0 0.0
        %1076 = vmatprep.subr.mxu0 0.0
        %1077 = vmatpush1.msra.mxu0 0.0
        %1078 = vmatprep.subr.mxu0 0.0
        %1079 = vmatpush1.msra.mxu0 0.0
        %1080 = vmatprep.subr.mxu0 0.0
        %1081 = vmatpush1.msra.mxu0 0.0
        %1082 = vmatprep.subr.mxu0 0.0
        %1083 = vmatpush1.msra.mxu0 0.0
        %1084 = vmatprep.subr.mxu0 0.0
        %1085 = vmatpush1.msra.mxu0 0.0
        %1086 = vmatprep.subr.mxu0 0.0
        %1087 = vmatpush1.msra.mxu0 0.0
        %1088 = vmatprep.subr.mxu0 0.0
        %1089 = vmatpush1.msra.mxu0 0.0
        %1090 = vmatprep.subr.mxu0 0.0
        %1091 = vmatpush1.msra.mxu0 0.0
        %1092 = vmatprep.subr.mxu0 0.0
        %1093 = vmatpush1.msra.mxu0 0.0
        %1094 = vmatprep.subr.mxu0 0.0
        %1095 = vmatpush1.msra.mxu0 0.0
        %1096 = vmatprep.subr.mxu0 0.0
        %1097 = vmatpush1.msra.mxu0 0.0
        %1098 = vmatprep.subr.mxu0 0.0
        %1099 = vmatpush1.msra.mxu0 0.0
        %1100 = vmatprep.subr.mxu0 0.0
        %1101 = vmatpush1.msra.mxu0 0.0
        %1102 = vmatprep.subr.mxu0 0.0
        %1103 = vmatpush1.msra.mxu0 0.0
        %1104 = vmatprep.subr.mxu0 0.0
        %1105 = vmatpush1.msra.mxu0 0.0
        %1106 = vmatprep.subr.mxu0 0.0
        %1107 = vmatpush1.msra.mxu0 0.0
        %1108 = vmatprep.subr.mxu0 0.0
        %1109 = vmatpush1.msra.mxu0 0.0
        %1110 = vmatprep.subr.mxu0 0.0
        %1111 = vmatpush1.msra.mxu0 0.0
        %1112 = vmatprep.subr.mxu0 0.0
        %1113 = vmatpush1.msra.mxu0 0.0
        %1114 = vmatprep.subr.mxu0 0.0
        %1115 = vmatpush1.msra.mxu0 0.0
        %1116 = vmatprep.subr.mxu0 0.0
        %1117 = vmatpush1.msra.mxu0 0.0
        %1118 = vmatprep.subr.mxu0 0.0
        %1119 = vmatpush1.msra.mxu0 0.0
        %1120 = vmatprep.subr.mxu0 0.0
        %1121 = vmatpush1.msra.mxu0 0.0
        %1122 = vmatprep.subr.mxu0 0.0
        %1123 = vmatpush1.msra.mxu0 0.0
        %1124 = vmatprep.subr.mxu0 0.0
        %1125 = vmatpush1.msra.mxu0 0.0
        %1126 = vmatprep.mubr.f32.mxu0 0.0
        %1127 = vmatmul.mubr.f32.gmra.mrb[0].mxu0 %v583
        %v1128 = vpop.f32.mrb[0].mxu0
        %v1129 = vadd.f32 %v574, %v1128
        %v1130 = vpop.f32.mrb[0].mxu0
        %1131 = vmatprep.mubr.f32.mxu0 0.0
        %1132 = vmatmul.mubr.f32.gmra.mrb[0].mxu0 %v586
        %v1133 = vpop.f32.mrb[0].mxu0
        %v1134 = vadd.f32 %v579, %v1133
        %v1135 = vpop.f32.mrb[0].mxu0
        %1136 = vdwg.mxu0
        %v1137 = vmax.f32 %v1129, 0.0
        %v1138 = vmax.f32 %v1134, 0.0
        %1139 = vmatprep.subr.mxu0 0.0
        %1140 = vmatpush1.msra.mxu0 %v1137
        %1141 = vmatprep.subr.mxu0 0.0
        %1142 = vmatpush1.msra.mxu0 %v1138
        %1143 = vmatprep.subr.mxu0 0.0
        %1144 = vmatpush1.msra.mxu0 0.0
        %1145 = vmatprep.subr.mxu0 0.0
        %1146 = vmatpush1.msra.mxu0 0.0
        %1147 = vmatprep.subr.mxu0 0.0
        %1148 = vmatpush1.msra.mxu0 0.0
        %1149 = vmatprep.subr.mxu0 0.0
        %1150 = vmatpush1.msra.mxu0 0.0
        %1151 = vmatprep.subr.mxu0 0.0
        %1152 = vmatpush1.msra.mxu0 0.0
        %1153 = vmatprep.subr.mxu0 0.0
        %1154 = vmatpush1.msra.mxu0 0.0
        %1155 = vmatprep.subr.mxu0 0.0
        %1156 = vmatpush1.msra.mxu0 0.0
        %1157 = vmatprep.subr.mxu0 0.0
        %1158 = vmatpush1.msra.mxu0 0.0
        %1159 = vmatprep.subr.mxu0 0.0
        %1160 = vmatpush1.msra.mxu0 0.0
        %1161 = vmatprep.subr.mxu0 0.0
        %1162 = vmatpush1.msra.mxu0 0.0
        %1163 = vmatprep.subr.mxu0 0.0
        %1164 = vmatpush1.msra.mxu0 0.0
        %1165 = vmatprep.subr.mxu0 0.0
        %1166 = vmatpush1.msra.mxu0 0.0
        %1167 = vmatprep.subr.mxu0 0.0
        %1168 = vmatpush1.msra.mxu0 0.0
        %1169 = vmatprep.subr.mxu0 0.0
        %1170 = vmatpush1.msra.mxu0 0.0
        %1171 = vmatprep.subr.mxu0 0.0
        %1172 = vmatpush1.msra.mxu0 0.0
        %1173 = vmatprep.subr.mxu0 0.0
        %1174 = vmatpush1.msra.mxu0 0.0
        %1175 = vmatprep.subr.mxu0 0.0
        %1176 = vmatpush1.msra.mxu0 0.0
        %1177 = vmatprep.subr.mxu0 0.0
        %1178 = vmatpush1.msra.mxu0 0.0
        %1179 = vmatprep.subr.mxu0 0.0
        %1180 = vmatpush1.msra.mxu0 0.0
        %1181 = vmatprep.subr.mxu0 0.0
        %1182 = vmatpush1.msra.mxu0 0.0
        %1183 = vmatprep.subr.mxu0 0.0
        %1184 = vmatpush1.msra.mxu0 0.0
        %1185 = vmatprep.subr.mxu0 0.0
        %1186 = vmatpush1.msra.mxu0 0.0
        %1187 = vmatprep.subr.mxu0 0.0
        %1188 = vmatpush1.msra.mxu0 0.0
        %1189 = vmatprep.subr.mxu0 0.0
        %1190 = vmatpush1.msra.mxu0 0.0
        %1191 = vmatprep.subr.mxu0 0.0
        %1192 = vmatpush1.msra.mxu0 0.0
        %1193 = vmatprep.subr.mxu0 0.0
        %1194 = vmatpush1.msra.mxu0 0.0
        %1195 = vmatprep.subr.mxu0 0.0
        %1196 = vmatpush1.msra.mxu0 0.0
        %1197 = vmatprep.subr.mxu0 0.0
        %1198 = vmatpush1.msra.mxu0 0.0
        %1199 = vmatprep.subr.mxu0 0.0
        %1200 = vmatpush1.msra.mxu0 0.0
        %1201 = vmatprep.subr.mxu0 0.0
        %1202 = vmatpush1.msra.mxu0 0.0
        %1203 = vmatprep.mubr.f32.mxu0 0.0
        %1204 = vmatmul.mubr.f32.gmra.mrb[0].mxu0 %v677
        %v1205 = vpop.f32.mrb[0].mxu0
        %v1206 = vadd.f32 %v675, %v1205
        %v1207 = vpop.f32.mrb[0].mxu0
        %1208 = vdwg.mxu0
        %v1209 = vadd.f32 %v979, %v1206
        %s1210 = scalar_lea.vmem %s456, 3
        %v1211 = vld [vmem:[%s1210] sm:$0x1]
        %v1213 = vsel %vm486, %v1211, 0
        %1215 = vmatprep.subr.mxu0 0.0
        %1216 = vmatpush1.msra.mxu0 %v1213
        %1217 = vmatprep.subr.mxu0 0.0
        %1218 = vmatpush1.msra.mxu0 0.0
        %1219 = vmatprep.subr.mxu0 0.0
        %1220 = vmatpush1.msra.mxu0 0.0
        %1221 = vmatprep.subr.mxu0 0.0
        %1222 = vmatpush1.msra.mxu0 0.0
        %1223 = vmatprep.subr.mxu0 0.0
        %1224 = vmatpush1.msra.mxu0 0.0
        %1225 = vmatprep.subr.mxu0 0.0
        %1226 = vmatpush1.msra.mxu0 0.0
        %1227 = vmatprep.subr.mxu0 0.0
        %1228 = vmatpush1.msra.mxu0 0.0
        %1229 = vmatprep.subr.mxu0 0.0
        %1230 = vmatpush1.msra.mxu0 0.0
        %1231 = vmatprep.subr.mxu0 0.0
        %1232 = vmatpush1.msra.mxu0 0.0
        %1233 = vmatprep.subr.mxu0 0.0
        %1234 = vmatpush1.msra.mxu0 0.0
        %1235 = vmatprep.subr.mxu0 0.0
        %1236 = vmatpush1.msra.mxu0 0.0
        %1237 = vmatprep.subr.mxu0 0.0
        %1238 = vmatpush1.msra.mxu0 0.0
        %1239 = vmatprep.subr.mxu0 0.0
        %1240 = vmatpush1.msra.mxu0 0.0
        %1241 = vmatprep.subr.mxu0 0.0
        %1242 = vmatpush1.msra.mxu0 0.0
        %1243 = vmatprep.subr.mxu0 0.0
        %1244 = vmatpush1.msra.mxu0 0.0
        %1245 = vmatprep.subr.mxu0 0.0
        %1246 = vmatpush1.msra.mxu0 0.0
        %1247 = vmatprep.subr.mxu0 0.0
        %1248 = vmatpush1.msra.mxu0 0.0
        %1249 = vmatprep.subr.mxu0 0.0
        %1250 = vmatpush1.msra.mxu0 0.0
        %1251 = vmatprep.subr.mxu0 0.0
        %1252 = vmatpush1.msra.mxu0 0.0
        %1253 = vmatprep.subr.mxu0 0.0
        %1254 = vmatpush1.msra.mxu0 0.0
        %1255 = vmatprep.subr.mxu0 0.0
        %1256 = vmatpush1.msra.mxu0 0.0
        %1257 = vmatprep.subr.mxu0 0.0
        %1258 = vmatpush1.msra.mxu0 0.0
        %1259 = vmatprep.subr.mxu0 0.0
        %1260 = vmatpush1.msra.mxu0 0.0
        %1261 = vmatprep.subr.mxu0 0.0
        %1262 = vmatpush1.msra.mxu0 0.0
        %1263 = vmatprep.subr.mxu0 0.0
        %1264 = vmatpush1.msra.mxu0 0.0
        %1265 = vmatprep.subr.mxu0 0.0
        %1266 = vmatpush1.msra.mxu0 0.0
        %1267 = vmatprep.subr.mxu0 0.0
        %1268 = vmatpush1.msra.mxu0 0.0
        %1269 = vmatprep.subr.mxu0 0.0
        %1270 = vmatpush1.msra.mxu0 0.0
        %1271 = vmatprep.subr.mxu0 0.0
        %1272 = vmatpush1.msra.mxu0 0.0
        %1273 = vmatprep.subr.mxu0 0.0
        %1274 = vmatpush1.msra.mxu0 0.0
        %1275 = vmatprep.subr.mxu0 0.0
        %1276 = vmatpush1.msra.mxu0 0.0
        %1277 = vmatprep.subr.mxu0 0.0
        %1278 = vmatpush1.msra.mxu0 0.0
        %1279 = vmatprep.mubr.f32.mxu0 0.0
        %1280 = vmatmul.mubr.f32.gmra.mrb[0].mxu0 %v481
        %v1281 = vpop.f32.mrb[0].mxu0
        %v1282 = vadd.f32 %v472, %v1281
        %v1283 = vpop.f32.mrb[0].mxu0
        %1284 = vmatprep.mubr.f32.mxu0 0.0
        %1285 = vmatmul.mubr.f32.gmra.mrb[0].mxu0 %v484
        %v1286 = vpop.f32.mrb[0].mxu0
        %v1287 = vadd.f32 %v477, %v1286
        %v1288 = vpop.f32.mrb[0].mxu0
        %1289 = vdwg.mxu0
        %v1290 = vmax.f32 %v1282, 0.0
        %v1291 = vmax.f32 %v1287, 0.0
        %1292 = vmatprep.subr.mxu0 0.0
        %1293 = vmatpush1.msra.mxu0 %v1290
        %1294 = vmatprep.subr.mxu0 0.0
        %1295 = vmatpush1.msra.mxu0 %v1291
        %1296 = vmatprep.subr.mxu0 0.0
        %1297 = vmatpush1.msra.mxu0 0.0
        %1298 = vmatprep.subr.mxu0 0.0
        %1299 = vmatpush1.msra.mxu0 0.0
        %1300 = vmatprep.subr.mxu0 0.0
        %1301 = vmatpush1.msra.mxu0 0.0
        %1302 = vmatprep.subr.mxu0 0.0
        %1303 = vmatpush1.msra.mxu0 0.0
        %1304 = vmatprep.subr.mxu0 0.0
        %1305 = vmatpush1.msra.mxu0 0.0
        %1306 = vmatprep.subr.mxu0 0.0
        %1307 = vmatpush1.msra.mxu0 0.0
        %1308 = vmatprep.subr.mxu0 0.0
        %1309 = vmatpush1.msra.mxu0 0.0
        %1310 = vmatprep.subr.mxu0 0.0
        %1311 = vmatpush1.msra.mxu0 0.0
        %1312 = vmatprep.subr.mxu0 0.0
        %1313 = vmatpush1.msra.mxu0 0.0
        %1314 = vmatprep.subr.mxu0 0.0
        %1315 = vmatpush1.msra.mxu0 0.0
        %1316 = vmatprep.subr.mxu0 0.0
        %1317 = vmatpush1.msra.mxu0 0.0
        %1318 = vmatprep.subr.mxu0 0.0
        %1319 = vmatpush1.msra.mxu0 0.0
        %1320 = vmatprep.subr.mxu0 0.0
        %1321 = vmatpush1.msra.mxu0 0.0
        %1322 = vmatprep.subr.mxu0 0.0
        %1323 = vmatpush1.msra.mxu0 0.0
        %1324 = vmatprep.subr.mxu0 0.0
        %1325 = vmatpush1.msra.mxu0 0.0
        %1326 = vmatprep.subr.mxu0 0.0
        %1327 = vmatpush1.msra.mxu0 0.0
        %1328 = vmatprep.subr.mxu0 0.0
        %1329 = vmatpush1.msra.mxu0 0.0
        %1330 = vmatprep.subr.mxu0 0.0
        %1331 = vmatpush1.msra.mxu0 0.0
        %1332 = vmatprep.subr.mxu0 0.0
        %1333 = vmatpush1.msra.mxu0 0.0
        %1334 = vmatprep.subr.mxu0 0.0
        %1335 = vmatpush1.msra.mxu0 0.0
        %1336 = vmatprep.subr.mxu0 0.0
        %1337 = vmatpush1.msra.mxu0 0.0
        %1338 = vmatprep.subr.mxu0 0.0
        %1339 = vmatpush1.msra.mxu0 0.0
        %1340 = vmatprep.subr.mxu0 0.0
        %1341 = vmatpush1.msra.mxu0 0.0
        %1342 = vmatprep.subr.mxu0 0.0
        %1343 = vmatpush1.msra.mxu0 0.0
        %1344 = vmatprep.subr.mxu0 0.0
        %1345 = vmatpush1.msra.mxu0 0.0
        %1346 = vmatprep.subr.mxu0 0.0
        %1347 = vmatpush1.msra.mxu0 0.0
        %1348 = vmatprep.subr.mxu0 0.0
        %1349 = vmatpush1.msra.mxu0 0.0
        %1350 = vmatprep.subr.mxu0 0.0
        %1351 = vmatpush1.msra.mxu0 0.0
        %1352 = vmatprep.subr.mxu0 0.0
        %1353 = vmatpush1.msra.mxu0 0.0
        %1354 = vmatprep.subr.mxu0 0.0
        %1355 = vmatpush1.msra.mxu0 0.0
        %1356 = vmatprep.mubr.f32.mxu0 0.0
        %1357 = vmatmul.mubr.f32.gmra.mrb[0].mxu0 %v583
        %v1358 = vpop.f32.mrb[0].mxu0
        %v1359 = vadd.f32 %v574, %v1358
        %v1360 = vpop.f32.mrb[0].mxu0
        %1361 = vmatprep.mubr.f32.mxu0 0.0
        %1362 = vmatmul.mubr.f32.gmra.mrb[0].mxu0 %v586
        %v1363 = vpop.f32.mrb[0].mxu0
        %v1364 = vadd.f32 %v579, %v1363
        %v1365 = vpop.f32.mrb[0].mxu0
        %1366 = vdwg.mxu0
        %v1367 = vmax.f32 %v1359, 0.0
        %v1368 = vmax.f32 %v1364, 0.0
        %1369 = vmatprep.subr.mxu0 0.0
        %1370 = vmatpush1.msra.mxu0 %v1367
        %1371 = vmatprep.subr.mxu0 0.0
        %1372 = vmatpush1.msra.mxu0 %v1368
        %1373 = vmatprep.subr.mxu0 0.0
        %1374 = vmatpush1.msra.mxu0 0.0
        %1375 = vmatprep.subr.mxu0 0.0
        %1376 = vmatpush1.msra.mxu0 0.0
        %1377 = vmatprep.subr.mxu0 0.0
        %1378 = vmatpush1.msra.mxu0 0.0
        %1379 = vmatprep.subr.mxu0 0.0
        %1380 = vmatpush1.msra.mxu0 0.0
        %1381 = vmatprep.subr.mxu0 0.0
        %1382 = vmatpush1.msra.mxu0 0.0
        %1383 = vmatprep.subr.mxu0 0.0
        %1384 = vmatpush1.msra.mxu0 0.0
        %1385 = vmatprep.subr.mxu0 0.0
        %1386 = vmatpush1.msra.mxu0 0.0
        %1387 = vmatprep.subr.mxu0 0.0
        %1388 = vmatpush1.msra.mxu0 0.0
        %1389 = vmatprep.subr.mxu0 0.0
        %1390 = vmatpush1.msra.mxu0 0.0
        %1391 = vmatprep.subr.mxu0 0.0
        %1392 = vmatpush1.msra.mxu0 0.0
        %1393 = vmatprep.subr.mxu0 0.0
        %1394 = vmatpush1.msra.mxu0 0.0
        %1395 = vmatprep.subr.mxu0 0.0
        %1396 = vmatpush1.msra.mxu0 0.0
        %1397 = vmatprep.subr.mxu0 0.0
        %1398 = vmatpush1.msra.mxu0 0.0
        %1399 = vmatprep.subr.mxu0 0.0
        %1400 = vmatpush1.msra.mxu0 0.0
        %1401 = vmatprep.subr.mxu0 0.0
        %1402 = vmatpush1.msra.mxu0 0.0
        %1403 = vmatprep.subr.mxu0 0.0
        %1404 = vmatpush1.msra.mxu0 0.0
        %1405 = vmatprep.subr.mxu0 0.0
        %1406 = vmatpush1.msra.mxu0 0.0
        %1407 = vmatprep.subr.mxu0 0.0
        %1408 = vmatpush1.msra.mxu0 0.0
        %1409 = vmatprep.subr.mxu0 0.0
        %1410 = vmatpush1.msra.mxu0 0.0
        %1411 = vmatprep.subr.mxu0 0.0
        %1412 = vmatpush1.msra.mxu0 0.0
        %1413 = vmatprep.subr.mxu0 0.0
        %1414 = vmatpush1.msra.mxu0 0.0
        %1415 = vmatprep.subr.mxu0 0.0
        %1416 = vmatpush1.msra.mxu0 0.0
        %1417 = vmatprep.subr.mxu0 0.0
        %1418 = vmatpush1.msra.mxu0 0.0
        %1419 = vmatprep.subr.mxu0 0.0
        %1420 = vmatpush1.msra.mxu0 0.0
        %1421 = vmatprep.subr.mxu0 0.0
        %1422 = vmatpush1.msra.mxu0 0.0
        %1423 = vmatprep.subr.mxu0 0.0
        %1424 = vmatpush1.msra.mxu0 0.0
        %1425 = vmatprep.subr.mxu0 0.0
        %1426 = vmatpush1.msra.mxu0 0.0
        %1427 = vmatprep.subr.mxu0 0.0
        %1428 = vmatpush1.msra.mxu0 0.0
        %1429 = vmatprep.subr.mxu0 0.0
        %1430 = vmatpush1.msra.mxu0 0.0
        %1431 = vmatprep.subr.mxu0 0.0
        %1432 = vmatpush1.msra.mxu0 0.0
        %1433 = vmatprep.mubr.f32.mxu0 0.0
        %1434 = vmatmul.mubr.f32.gmra.mrb[0].mxu0 %v677
        %v1435 = vpop.f32.mrb[0].mxu0
        %v1436 = vadd.f32 %v675, %v1435
        %v1437 = vpop.f32.mrb[0].mxu0
        %1438 = vdwg.mxu0
        %v1439 = vadd.f32 %v1209, %v1436
        %v1440 = vld [vmem:[#allocation2] sm:$0x1]
        %v1441 = vadd.f32 %v1440, %v1439
        %vm1442 = vcmask 8192
        %1443 = vst.msk [vmem:[#allocation2] sm:$0x1] %vm1442, %v1441
        %p1444 = scmp.eq.s32.totalorder %s34, 1
        // Predicated region
        $region77: #{tpu_custom_call.1} parent=71 // pred_check
          %p1445 = pneg %p1444
        $region78: #{tpu_custom_call.1} parent=71 // pred_check_branch
          %1447 = sbr.rel (%p1445) target = $region80
        $region79: #{tpu_custom_call.1} parent=71 // pred_region
          %v1448 = vld [vmem:[#allocation2] sm:$0x1]
          %v1449 = vmul.f32 %v1448, 0.125
          %v1450 = vld [vmem:[%s7] sm:$0xff]
          %v1451 = vld [vmem:[%s7 + $0x8] sm:$0xff]
          %v1452 = vld [vmem:[%s8] sm:$0xff]
          %v1453 = vld [vmem:[%s8 + $0x8] sm:$0xff]
          %1455 = vset.pattern.permute.xlu0 0
          %1456 = vperm.xlu0 %1455, %v1452
          %v1457 = vpop.permute.xlu0 %1456
          %1460 = vset.pattern.permute.xlu0 0
          %1461 = vperm.xlu0 %1460, %v1453
          %v1462 = vpop.permute.xlu0 %1461
          %v1465 = vsel %vm479, %v1450, 0
          %v1468 = vsel %vm479, %v1451, 0
          %v1471 = vsel %vm486, %v1449, 0
          %1473 = vmatprep.subr.mxu0 0.0
          %1474 = vmatpush1.msra.mxu0 %v1471
          %1475 = vmatprep.subr.mxu0 0.0
          %1476 = vmatpush1.msra.mxu0 0.0
          %1477 = vmatprep.subr.mxu0 0.0
          %1478 = vmatpush1.msra.mxu0 0.0
          %1479 = vmatprep.subr.mxu0 0.0
          %1480 = vmatpush1.msra.mxu0 0.0
          %1481 = vmatprep.subr.mxu0 0.0
          %1482 = vmatpush1.msra.mxu0 0.0
          %1483 = vmatprep.subr.mxu0 0.0
          %1484 = vmatpush1.msra.mxu0 0.0
          %1485 = vmatprep.subr.mxu0 0.0
          %1486 = vmatpush1.msra.mxu0 0.0
          %1487 = vmatprep.subr.mxu0 0.0
          %1488 = vmatpush1.msra.mxu0 0.0
          %1489 = vmatprep.subr.mxu0 0.0
          %1490 = vmatpush1.msra.mxu0 0.0
          %1491 = vmatprep.subr.mxu0 0.0
          %1492 = vmatpush1.msra.mxu0 0.0
          %1493 = vmatprep.subr.mxu0 0.0
          %1494 = vmatpush1.msra.mxu0 0.0
          %1495 = vmatprep.subr.mxu0 0.0
          %1496 = vmatpush1.msra.mxu0 0.0
          %1497 = vmatprep.subr.mxu0 0.0
          %1498 = vmatpush1.msra.mxu0 0.0
          %1499 = vmatprep.subr.mxu0 0.0
          %1500 = vmatpush1.msra.mxu0 0.0
          %1501 = vmatprep.subr.mxu0 0.0
          %1502 = vmatpush1.msra.mxu0 0.0
          %1503 = vmatprep.subr.mxu0 0.0
          %1504 = vmatpush1.msra.mxu0 0.0
          %1505 = vmatprep.subr.mxu0 0.0
          %1506 = vmatpush1.msra.mxu0 0.0
          %1507 = vmatprep.subr.mxu0 0.0
          %1508 = vmatpush1.msra.mxu0 0.0
          %1509 = vmatprep.subr.mxu0 0.0
          %1510 = vmatpush1.msra.mxu0 0.0
          %1511 = vmatprep.subr.mxu0 0.0
          %1512 = vmatpush1.msra.mxu0 0.0
          %1513 = vmatprep.subr.mxu0 0.0
          %1514 = vmatpush1.msra.mxu0 0.0
          %1515 = vmatprep.subr.mxu0 0.0
          %1516 = vmatpush1.msra.mxu0 0.0
          %1517 = vmatprep.subr.mxu0 0.0
          %1518 = vmatpush1.msra.mxu0 0.0
          %1519 = vmatprep.subr.mxu0 0.0
          %1520 = vmatpush1.msra.mxu0 0.0
          %1521 = vmatprep.subr.mxu0 0.0
          %1522 = vmatpush1.msra.mxu0 0.0
          %1523 = vmatprep.subr.mxu0 0.0
          %1524 = vmatpush1.msra.mxu0 0.0
          %1525 = vmatprep.subr.mxu0 0.0
          %1526 = vmatpush1.msra.mxu0 0.0
          %1527 = vmatprep.subr.mxu0 0.0
          %1528 = vmatpush1.msra.mxu0 0.0
          %1529 = vmatprep.subr.mxu0 0.0
          %1530 = vmatpush1.msra.mxu0 0.0
          %1531 = vmatprep.subr.mxu0 0.0
          %1532 = vmatpush1.msra.mxu0 0.0
          %1533 = vmatprep.subr.mxu0 0.0
          %1534 = vmatpush1.msra.mxu0 0.0
          %1535 = vmatprep.subr.mxu0 0.0
          %1536 = vmatpush1.msra.mxu0 0.0
          %1537 = vmatprep.mubr.f32.mxu0 0.0
          %1538 = vmatmul.mubr.f32.gmra.mrb[0].mxu0 %v1465
          %v1539 = vpop.f32.mrb[0].mxu0
          %v1540 = vadd.f32 %v1457, %v1539
          %v1541 = vpop.f32.mrb[0].mxu0
          %1542 = vmatprep.mubr.f32.mxu0 0.0
          %1543 = vmatmul.mubr.f32.gmra.mrb[0].mxu0 %v1468
          %v1544 = vpop.f32.mrb[0].mxu0
          %v1545 = vadd.f32 %v1462, %v1544
          %v1546 = vpop.f32.mrb[0].mxu0
          %1547 = vdwg.mxu0
          %v1548 = vmax.f32 %v1540, 0.0
          %v1549 = vmax.f32 %v1545, 0.0
          %v1550 = vld [vmem:[%s9] sm:$0xff]
          %v1551 = vld [vmem:[%s9 + $0x8] sm:$0xff]
          %v1552 = vld [vmem:[%s10] sm:$0xff]
          %v1553 = vld [vmem:[%s10 + $0x8] sm:$0xff]
          %1555 = vset.pattern.permute.xlu0 0
          %1556 = vperm.xlu0 %1555, %v1552
          %v1557 = vpop.permute.xlu0 %1556
          %1560 = vset.pattern.permute.xlu0 0
          %1561 = vperm.xlu0 %1560, %v1553
          %v1562 = vpop.permute.xlu0 %1561
          %v1565 = vsel %vm581, %v1550, 0
          %v1568 = vsel %vm581, %v1551, 0
          %1570 = vmatprep.subr.mxu0 0.0
          %1571 = vmatpush1.msra.mxu0 %v1548
          %1572 = vmatprep.subr.mxu0 0.0
          %1573 = vmatpush1.msra.mxu0 %v1549
          %1574 = vmatprep.subr.mxu0 0.0
          %1575 = vmatpush1.msra.mxu0 0.0
          %1576 = vmatprep.subr.mxu0 0.0
          %1577 = vmatpush1.msra.mxu0 0.0
          %1578 = vmatprep.subr.mxu0 0.0
          %1579 = vmatpush1.msra.mxu0 0.0
          %1580 = vmatprep.subr.mxu0 0.0
          %1581 = vmatpush1.msra.mxu0 0.0
          %1582 = vmatprep.subr.mxu0 0.0
          %1583 = vmatpush1.msra.mxu0 0.0
          %1584 = vmatprep.subr.mxu0 0.0
          %1585 = vmatpush1.msra.mxu0 0.0
          %1586 = vmatprep.subr.mxu0 0.0
          %1587 = vmatpush1.msra.mxu0 0.0
          %1588 = vmatprep.subr.mxu0 0.0
          %1589 = vmatpush1.msra.mxu0 0.0
          %1590 = vmatprep.subr.mxu0 0.0
          %1591 = vmatpush1.msra.mxu0 0.0
          %1592 = vmatprep.subr.mxu0 0.0
          %1593 = vmatpush1.msra.mxu0 0.0
          %1594 = vmatprep.subr.mxu0 0.0
          %1595 = vmatpush1.msra.mxu0 0.0
          %1596 = vmatprep.subr.mxu0 0.0
          %1597 = vmatpush1.msra.mxu0 0.0
          %1598 = vmatprep.subr.mxu0 0.0
          %1599 = vmatpush1.msra.mxu0 0.0
          %1600 = vmatprep.subr.mxu0 0.0
          %1601 = vmatpush1.msra.mxu0 0.0
          %1602 = vmatprep.subr.mxu0 0.0
          %1603 = vmatpush1.msra.mxu0 0.0
          %1604 = vmatprep.subr.mxu0 0.0
          %1605 = vmatpush1.msra.mxu0 0.0
          %1606 = vmatprep.subr.mxu0 0.0
          %1607 = vmatpush1.msra.mxu0 0.0
          %1608 = vmatprep.subr.mxu0 0.0
          %1609 = vmatpush1.msra.mxu0 0.0
          %1610 = vmatprep.subr.mxu0 0.0
          %1611 = vmatpush1.msra.mxu0 0.0
          %1612 = vmatprep.subr.mxu0 0.0
          %1613 = vmatpush1.msra.mxu0 0.0
          %1614 = vmatprep.subr.mxu0 0.0
          %1615 = vmatpush1.msra.mxu0 0.0
          %1616 = vmatprep.subr.mxu0 0.0
          %1617 = vmatpush1.msra.mxu0 0.0
          %1618 = vmatprep.subr.mxu0 0.0
          %1619 = vmatpush1.msra.mxu0 0.0
          %1620 = vmatprep.subr.mxu0 0.0
          %1621 = vmatpush1.msra.mxu0 0.0
          %1622 = vmatprep.subr.mxu0 0.0
          %1623 = vmatpush1.msra.mxu0 0.0
          %1624 = vmatprep.subr.mxu0 0.0
          %1625 = vmatpush1.msra.mxu0 0.0
          %1626 = vmatprep.subr.mxu0 0.0
          %1627 = vmatpush1.msra.mxu0 0.0
          %1628 = vmatprep.subr.mxu0 0.0
          %1629 = vmatpush1.msra.mxu0 0.0
          %1630 = vmatprep.subr.mxu0 0.0
          %1631 = vmatpush1.msra.mxu0 0.0
          %1632 = vmatprep.subr.mxu0 0.0
          %1633 = vmatpush1.msra.mxu0 0.0
          %1634 = vmatprep.mubr.f32.mxu0 0.0
          %1635 = vmatmul.mubr.f32.gmra.mrb[0].mxu0 %v1565
          %v1636 = vpop.f32.mrb[0].mxu0
          %v1637 = vadd.f32 %v1557, %v1636
          %v1638 = vpop.f32.mrb[0].mxu0
          %1639 = vmatprep.mubr.f32.mxu0 0.0
          %1640 = vmatmul.mubr.f32.gmra.mrb[0].mxu0 %v1568
          %v1641 = vpop.f32.mrb[0].mxu0
          %v1642 = vadd.f32 %v1562, %v1641
          %v1643 = vpop.f32.mrb[0].mxu0
          %1644 = vdwg.mxu0
          %v1645 = vmax.f32 %v1637, 0.0
          %v1646 = vmax.f32 %v1642, 0.0
          %v1647 = vld [vmem:[%s11] sm:$0x1]
          %v1648 = vld [vmem:[#allocation4] sm:$0x1]
          %1650 = vset.pattern.permute.xlu0 0
          %1651 = vperm.xlu0 %1650, %v1648
          %v1652 = vpop.permute.xlu0 %1651
          %v1654 = vlaneseq
          %v1655 = vshrl.u32 %v1654, 7
          %v1656 = vsub.s32 0, %v1655
          %v1657 = vrot.slane %v1652, %v1656
          %v1659 = vsel %vm581, %v1647, 0
          %1661 = vmatprep.subr.mxu0 0.0
          %1662 = vmatpush1.msra.mxu0 %v1645
          %1663 = vmatprep.subr.mxu0 0.0
          %1664 = vmatpush1.msra.mxu0 %v1646
          %1665 = vmatprep.subr.mxu0 0.0
          %1666 = vmatpush1.msra.mxu0 0.0
          %1667 = vmatprep.subr.mxu0 0.0
          %1668 = vmatpush1.msra.mxu0 0.0
          %1669 = vmatprep.subr.mxu0 0.0
          %1670 = vmatpush1.msra.mxu0 0.0
          %1671 = vmatprep.subr.mxu0 0.0
          %1672 = vmatpush1.msra.mxu0 0.0
          %1673 = vmatprep.subr.mxu0 0.0
          %1674 = vmatpush1.msra.mxu0 0.0
          %1675 = vmatprep.subr.mxu0 0.0
          %1676 = vmatpush1.msra.mxu0 0.0
          %1677 = vmatprep.subr.mxu0 0.0
          %1678 = vmatpush1.msra.mxu0 0.0
          %1679 = vmatprep.subr.mxu0 0.0
          %1680 = vmatpush1.msra.mxu0 0.0
          %1681 = vmatprep.subr.mxu0 0.0
          %1682 = vmatpush1.msra.mxu0 0.0
          %1683 = vmatprep.subr.mxu0 0.0
          %1684 = vmatpush1.msra.mxu0 0.0
          %1685 = vmatprep.subr.mxu0 0.0
          %1686 = vmatpush1.msra.mxu0 0.0
          %1687 = vmatprep.subr.mxu0 0.0
          %1688 = vmatpush1.msra.mxu0 0.0
          %1689 = vmatprep.subr.mxu0 0.0
          %1690 = vmatpush1.msra.mxu0 0.0
          %1691 = vmatprep.subr.mxu0 0.0
          %1692 = vmatpush1.msra.mxu0 0.0
          %1693 = vmatprep.subr.mxu0 0.0
          %1694 = vmatpush1.msra.mxu0 0.0
          %1695 = vmatprep.subr.mxu0 0.0
          %1696 = vmatpush1.msra.mxu0 0.0
          %1697 = vmatprep.subr.mxu0 0.0
          %1698 = vmatpush1.msra.mxu0 0.0
          %1699 = vmatprep.subr.mxu0 0.0
          %1700 = vmatpush1.msra.mxu0 0.0
          %1701 = vmatprep.subr.mxu0 0.0
          %1702 = vmatpush1.msra.mxu0 0.0
          %1703 = vmatprep.subr.mxu0 0.0
          %1704 = vmatpush1.msra.mxu0 0.0
          %1705 = vmatprep.subr.mxu0 0.0
          %1706 = vmatpush1.msra.mxu0 0.0
          %1707 = vmatprep.subr.mxu0 0.0
          %1708 = vmatpush1.msra.mxu0 0.0
          %1709 = vmatprep.subr.mxu0 0.0
          %1710 = vmatpush1.msra.mxu0 0.0
          %1711 = vmatprep.subr.mxu0 0.0
          %1712 = vmatpush1.msra.mxu0 0.0
          %1713 = vmatprep.subr.mxu0 0.0
          %1714 = vmatpush1.msra.mxu0 0.0
          %1715 = vmatprep.subr.mxu0 0.0
          %1716 = vmatpush1.msra.mxu0 0.0
          %1717 = vmatprep.subr.mxu0 0.0
          %1718 = vmatpush1.msra.mxu0 0.0
          %1719 = vmatprep.subr.mxu0 0.0
          %1720 = vmatpush1.msra.mxu0 0.0
          %1721 = vmatprep.subr.mxu0 0.0
          %1722 = vmatpush1.msra.mxu0 0.0
          %1723 = vmatprep.subr.mxu0 0.0
          %1724 = vmatpush1.msra.mxu0 0.0
          %1725 = vmatprep.mubr.f32.mxu0 0.0
          %1726 = vmatmul.mubr.f32.gmra.mrb[0].mxu0 %v1659
          %v1727 = vpop.f32.mrb[0].mxu0
          %v1728 = vadd.f32 %v1657, %v1727
          %v1729 = vpop.f32.mrb[0].mxu0
          %1730 = vdwg.mxu0
          %1731 = vst.msk [vmem:[#allocation5] sm:$0x1] %vm1442, %v1728
        $region80: #{tpu_custom_call.1} parent=71 // pred_fallthru
          _
        // Predicated region
        $region81: #{tpu_custom_call.1} parent=71 // pred_check
          %p1732 = pneg %p339
        $region82: #{tpu_custom_call.1} parent=71 // pred_check_branch
          %1734 = sbr.rel (%p1732) target = $region84
        $region83: #{tpu_custom_call.1} parent=71 // pred_region
          %s1736 = ssub.s32 16, 16
          %1737 = vsyncadd [#allocation6], %s1736
          %s1738 = smul.addr %s33, 16
          %s1739 = scalar_lea.hbm %s13, %s1738
          %s1741 = sshll.u32 [#allocation5], 4
          %s1742 = int_to_ptr.vmem [resolvable:$true] %s1741
          %1744 = dma.vmem_to_hbm [thread:$0]  %s1742, 16, %s1739, [#allocation6]
        $region84: #{tpu_custom_call.1} parent=71 // pred_fallthru
          _
        // Predicated region
        $region85: #{tpu_custom_call.1} parent=71 // pred_check
          %p1745 = pneg %p339
        $region86: #{tpu_custom_call.1} parent=71 // pred_check_branch
          %1747 = sbr.rel (%p1745) target = $region88
        $region87: #{tpu_custom_call.1} parent=71 // pred_region
          %1748 = dma.done [#allocation6], 16
        $region88: #{tpu_custom_call.1} parent=71 // pred_fallthru
          _
      $region72: #{tpu_custom_call.1} parent=5 // pred_fallthru
        _
      %p1749 = scmp.le.s32.totalorder 2, %s24
      // Predicated region
      $region89: #{tpu_custom_call.1} parent=5 // pred_check
        %p1750 = pneg %p1749
      $region90: #{tpu_custom_call.1} parent=5 // pred_check_branch
        %1752 = sbr.rel (%p1750) target = $region92
      $region91: #{tpu_custom_call.1} parent=5 // pred_region
        %s1753 = ssub.s32 %s24, 2
      $region92: #{tpu_custom_call.1} parent=5 // pred_fallthru
        _
    $region6: #{tpu_custom_call.1} parent=1 // loop_footer
      %s28 = sadd.s32 1, %s24
    $region7: #{tpu_custom_call.1} parent=1 // loop_footer_branch
      %23 = sbr.rel target = $region3
    $region8: #{tpu_custom_call.1} parent=1 // loop_exit
      _
    %1754 = vsyncpa [#allocation6], 1
    %s1755 = scalar_lea.sflag [#allocation6], 1
    %1756 = vsyncpa %s1755, 1

</llo_original>
